<compile_context>
chip_gen: v6e
topology: v6e:2x2x1
jax: 0.10.0
libtpu: 0.0.40
codegen_flags: <defaults>
</compile_context>

<pallas_src>
import functools

import jax
import jax.numpy as jnp
from jax.experimental import pallas as pl
from jax.experimental.pallas import tpu as pltpu

NODES = 28          # self.nodes in the PyTorch module
HIDDEN = 32         # latent_size
NUM_CLASSES = 4     # A2Softmax primitive classes (labels = torch.zeros(4))
OUT_PAD = 128       # lane-dense padded class dim for the output store


def _odevae_kernel(x_ref, tcol_ref, tgt_ref,
                   ewih_x_ref, ewih_t_ref, ebih_ref, ewhh_ref, ebhh_ref,
                   dwih_ref, dbih_ref, dwhh_ref, dbhh_ref,
                   ow_ref, ob_ref,
                   dec_out_ref, h_all_ref, *, T, B):
    """Encoder GRU -> decoder GRU -> batched linear+softmax, single kernel."""
    H = HIDDEN

    # ---- one-time weight loads (packed 96-lane gate layout, no splits) ----
    ewhh = ewhh_ref[...]                      # (H, 3H)
    dwhh = dwhh_ref[...]                      # (H, 3H)
    ebhh = ebhh_ref[...]                      # (1, 3H)
    dbhh = dbhh_ref[...]                      # (1, 3H)
    ebhh_n = ebhh[:, 2 * H:]                  # only the n-gate bias stays in-loop
    dbhh_n = dbhh[:, 2 * H:]

    # ---- hoisted input-side matmuls (batched over T*B, one MXU push each) ----
    # time column (1..T) is an extra encoder feature handled as
    # x @ W[:D] + t * W[D:]  (no lane concat needed).  NOTE: this assumes the
    # time feature is the LAST encoder input column (matches init_params).
    gi_enc = (jnp.dot(x_ref[...], ewih_x_ref[...],
                      preferred_element_type=jnp.float32)
              + tcol_ref[...] * ewih_t_ref[...] + ebih_ref[...])
    # Fold the constant hidden biases b_hr / b_hz into the hoisted gi once.
    gie_rz = gi_enc[:, :2 * H] + ebhh[:, :2 * H]
    gie_n = gi_enc[:, 2 * H:]

    gi_dec = (jnp.dot(tgt_ref[...], dwih_ref[...],
                      preferred_element_type=jnp.float32)
              + dbih_ref[...])
    gid_rz = gi_dec[:, :2 * H] + dbhh[:, :2 * H]
    gid_n = gi_dec[:, 2 * H:]

    def gru_step(gi_rz, gi_n, h, whh, bhh_n):
        # One fused (B,H)@(H,3H) hidden matmul on the serial critical path.
        gh = jnp.dot(h, whh, preferred_element_type=jnp.float32)      # (B, 3H)
        # sigmoid(x) = 0.5*(tanh(x/2)+1): single EUP op over the [r|z] block.
        rz = 0.5 * jnp.tanh(0.5 * (gi_rz + gh[:, :2 * H])) + 0.5      # (B, 2H)
        r = rz[:, :H]
        z = rz[:, H:]
        # PyTorch GRUCell: n = tanh(W_in x + b_in + r*(W_hn h + b_hn))
        n = jnp.tanh(gi_n + r * (gh[:, 2 * H:] + bhh_n))
        return (1.0 - z) * n + z * h

    # ---- encoder recurrence (fully unrolled; T is compile-time constant) ----
    h = jnp.zeros((B, H), jnp.float32)          # encoder_hidden init (zeros)
    for t in range(T):
        lo = t * B
        h = gru_step(gie_rz[lo:lo + B], gie_n[lo:lo + B], h, ewhh, ebhh_n)

    # ---- decoder recurrence: stash hidden states for the batched epilogue ----
    # Per-step (B,H) stores are off the h-dependence chain.
    for t in range(T):
        lo = t * B
        h = gru_step(gid_rz[lo:lo + B], gid_n[lo:lo + B], h, dwhh, dbhh_n)
        h_all_ref[pl.ds(lo, B), :] = h

    # ---- batched projection + softmax epilogue (lane-dense 128-wide store) ----
    # ow/ob are host-padded: cols >= NUM_CLASSES have zero weight and a -1e30
    # bias, so their softmax probability is exactly 0 and no masking is needed.
    logits = (jnp.dot(h_all_ref[...], ow_ref[...],
                      preferred_element_type=jnp.float32) + ob_ref[...])
    m = jnp.max(logits, axis=-1, keepdims=True)
    e = jnp.exp(logits - m)
    denom = jnp.sum(e, axis=-1, keepdims=True)
    # Exact reciprocal: the output feeds a CE loss in train()/evaluate().
    dec_out_ref[...] = e * pl.reciprocal(denom, approx=False)


def init_params(key, enc_in_dim, hidden, n_classes):
    """Deterministic synthetic parameter init (uniform +-1/sqrt(H), PyTorch-GRU style)."""
    ks = jax.random.split(key, 10)
    s = 1.0 / jnp.sqrt(jnp.float32(hidden))

    def u(k, shape):
        return jax.random.uniform(k, shape, jnp.float32, -s, s)

    enc_wih = u(ks[0], (enc_in_dim, 3 * hidden))       # last row == time feature
    out_w = u(ks[8], (hidden, n_classes))
    out_b = u(ks[9], (1, n_classes))
    # Lane-pad the output projection to 128 classes (zero weights, -1e30 bias).
    out_w_pad = jnp.zeros((hidden, OUT_PAD), jnp.float32).at[:, :n_classes].set(out_w)
    out_b_pad = jnp.full((1, OUT_PAD), -1e30, jnp.float32).at[:, :n_classes].set(out_b)

    return dict(
        enc_wih_x=enc_wih[:-1, :],                     # (D, 3H)
        enc_wih_t=enc_wih[-1:, :],                     # (1, 3H)  time-feature row
        enc_bih=u(ks[2], (1, 3 * hidden)),
        enc_whh=u(ks[1], (hidden, 3 * hidden)),        # packed (H, 3H)
        enc_bhh=u(ks[3], (1, 3 * hidden)),
        dec_wih=u(ks[4], (n_classes, 3 * hidden)),
        dec_bih=u(ks[6], (1, 3 * hidden)),
        dec_whh=u(ks[5], (hidden, 3 * hidden)),        # packed (H, 3H)
        dec_bhh=u(ks[7], (1, 3 * hidden)),
        out_w=out_w_pad,                               # (H, 128)
        out_b=out_b_pad,                               # (1, 128)
    )


def odevae_forward(input_tensor, target_tensor, params):
    """Mirrors ODEVAE.forward(input_tensor, target_tensor), vectorized over B.

    input_tensor:  (T, B, 28*F)       float32  (B independent trajectories)
    target_tensor: (T, B, NUM_CLASSES) float32
    returns decoder_output: (T, B, NUM_CLASSES) softmax probabilities.
    """
    T, B, D = input_tensor.shape
    assert D % NODES == 0

    # input.reshape(T, B, 28, F) flattened per step == (T*B, 28*F); the B
    # trajectories become the matmul M / sublane dimension inside the kernel.
    x = input_tensor.reshape(T * B, D)
    tgt = target_tensor.reshape(T * B, NUM_CLASSES)
    # per-step time 1..T (same value for every trajectory within a step),
    # matching the module's timetable construction.
    tcol = jnp.repeat(jnp.arange(1, T + 1, dtype=jnp.float32), B)[:, None]

    vmem = pl.BlockSpec(memory_space=pltpu.MemorySpace.VMEM)
    kernel = functools.partial(_odevae_kernel, T=T, B=B)
    dec_out_pad = pl.pallas_call(
        kernel,
        out_shape=jax.ShapeDtypeStruct((T * B, OUT_PAD), jnp.float32),
        in_specs=[vmem] * 14,
        out_specs=vmem,
        scratch_shapes=[pltpu.VMEM((T * B, HIDDEN), jnp.float32)],
    )(x, tcol, tgt,
      params["enc_wih_x"], params["enc_wih_t"], params["enc_bih"],
      params["enc_whh"], params["enc_bhh"],
      params["dec_wih"], params["dec_bih"], params["dec_whh"], params["dec_bhh"],
      params["out_w"], params["out_b"])

    # decoder output keeps the (T, B, C) convention used by getPrimitive()/train().
    return dec_out_pad[:, :NUM_CLASSES].reshape(T, B, NUM_CLASSES)


if __name__ == "__main__":
    key = jax.random.PRNGKey(0)
    k_x, k_t, k_p = jax.random.split(key, 3)

    T, B, F = 8, 8, 4            # 8 steps, 8 batched trajectories, 4 feats/node
    D = NODES * F                # 112 = 28 * 4

    input_tensor = jax.random.normal(k_x, (T, B, D), jnp.float32)
    target_idx = jax.random.randint(k_t, (T, B), 0, NUM_CLASSES)
    target_tensor = jax.nn.one_hot(target_idx, NUM_CLASSES, dtype=jnp.float32)

    params = init_params(k_p, D + 1, HIDDEN, NUM_CLASSES)

    # TODO(synk): encoder/decoder optimizers and the CE loss (train/evaluate) are
    # training-time host logic with no kernel-side equivalent; only forward() is kernelized.
    out = odevae_forward(input_tensor, target_tensor, params)
    jax.block_until_ready(out)
    assert out.shape == (T, B, NUM_CLASSES)
    assert bool(jnp.all(jnp.isfinite(out)))
    assert bool(jnp.all(jnp.abs(jnp.sum(out, axis=-1) - 1.0) < 1e-4))
    print("KERNEL_OK")
</pallas_src>

<mosaic_0001>
module attributes {stable_mosaic.version = 11 : i64} {
  func.func @_odevae_kernel(%arg0: memref<64x112xf32, #tpu.memory_space<vmem>>, %arg1: memref<64x1xf32, #tpu.memory_space<vmem>>, %arg2: memref<64x4xf32, #tpu.memory_space<vmem>>, %arg3: memref<112x96xf32, #tpu.memory_space<vmem>>, %arg4: memref<1x96xf32, #tpu.memory_space<vmem>>, %arg5: memref<1x96xf32, #tpu.memory_space<vmem>>, %arg6: memref<32x96xf32, #tpu.memory_space<vmem>>, %arg7: memref<1x96xf32, #tpu.memory_space<vmem>>, %arg8: memref<4x96xf32, #tpu.memory_space<vmem>>, %arg9: memref<1x96xf32, #tpu.memory_space<vmem>>, %arg10: memref<32x96xf32, #tpu.memory_space<vmem>>, %arg11: memref<1x96xf32, #tpu.memory_space<vmem>>, %arg12: memref<32x128xf32, #tpu.memory_space<vmem>>, %arg13: memref<1x128xf32, #tpu.memory_space<vmem>>, %arg14: memref<64x128xf32, #tpu.memory_space<vmem>>, %arg15: memref<64x32xf32, #tpu.memory_space<vmem>>) attributes {dimension_semantics = [], scalar_prefetch = 0 : i64, scratch_operands = 1 : i64, tpu.core_type = #tpu.core_type<tc>} {
    %c0 = arith.constant 0 : index
    %c0_0 = arith.constant 0 : index
    %0 = vector.load %arg6[%c0, %c0_0] : memref<32x96xf32, #tpu.memory_space<vmem>>, vector<32x96xf32>
    %c0_1 = arith.constant 0 : index
    %c0_2 = arith.constant 0 : index
    %1 = vector.load %arg10[%c0_1, %c0_2] : memref<32x96xf32, #tpu.memory_space<vmem>>, vector<32x96xf32>
    %c0_3 = arith.constant 0 : index
    %c0_4 = arith.constant 0 : index
    %2 = vector.load %arg7[%c0_3, %c0_4] : memref<1x96xf32, #tpu.memory_space<vmem>>, vector<1x96xf32>
    %c0_5 = arith.constant 0 : index
    %c0_6 = arith.constant 0 : index
    %3 = vector.load %arg11[%c0_5, %c0_6] : memref<1x96xf32, #tpu.memory_space<vmem>>, vector<1x96xf32>
    %4 = vector.extract_strided_slice %2 {offsets = [0, 64], sizes = [1, 32], strides = [1, 1]} : vector<1x96xf32> to vector<1x32xf32>
    %5 = vector.extract_strided_slice %3 {offsets = [0, 64], sizes = [1, 32], strides = [1, 1]} : vector<1x96xf32> to vector<1x32xf32>
    %c0_7 = arith.constant 0 : index
    %c0_8 = arith.constant 0 : index
    %6 = vector.load %arg0[%c0_7, %c0_8] : memref<64x112xf32, #tpu.memory_space<vmem>>, vector<64x112xf32>
    %c0_9 = arith.constant 0 : index
    %c0_10 = arith.constant 0 : index
    %7 = vector.load %arg3[%c0_9, %c0_10] : memref<112x96xf32, #tpu.memory_space<vmem>>, vector<112x96xf32>
    %cst = arith.constant dense<0.000000e+00> : vector<64x96xf32>
    %8 = tpu.matmul %6, %7, %cst {dimension_numbers = #tpu.dot_dimension_numbers<[1], [0], [0], [1], [0, 0, 1, 1], [], []>} : vector<64x112xf32>, vector<112x96xf32>, vector<64x96xf32> -> vector<64x96xf32>
    %c0_11 = arith.constant 0 : index
    %c0_12 = arith.constant 0 : index
    %9 = vector.load %arg1[%c0_11, %c0_12] : memref<64x1xf32, #tpu.memory_space<vmem>>, vector<64x1xf32>
    %c0_13 = arith.constant 0 : index
    %c0_14 = arith.constant 0 : index
    %10 = vector.load %arg4[%c0_13, %c0_14] : memref<1x96xf32, #tpu.memory_space<vmem>>, vector<1x96xf32>
    %11 = vector.broadcast %9 : vector<64x1xf32> to vector<64x96xf32>
    %12 = vector.broadcast %10 : vector<1x96xf32> to vector<64x96xf32>
    %13 = arith.mulf %11, %12 : vector<64x96xf32>
    %14 = arith.addf %8, %13 : vector<64x96xf32>
    %c0_15 = arith.constant 0 : index
    %c0_16 = arith.constant 0 : index
    %15 = vector.load %arg5[%c0_15, %c0_16] : memref<1x96xf32, #tpu.memory_space<vmem>>, vector<1x96xf32>
    %16 = vector.broadcast %15 : vector<1x96xf32> to vector<64x96xf32>
    %17 = arith.addf %14, %16 : vector<64x96xf32>
    %18 = vector.extract_strided_slice %17 {offsets = [0, 0], sizes = [64, 64], strides = [1, 1]} : vector<64x96xf32> to vector<64x64xf32>
    %19 = vector.extract_strided_slice %2 {offsets = [0, 0], sizes = [1, 64], strides = [1, 1]} : vector<1x96xf32> to vector<1x64xf32>
    %20 = vector.broadcast %19 : vector<1x64xf32> to vector<64x64xf32>
    %21 = arith.addf %18, %20 : vector<64x64xf32>
    %22 = vector.extract_strided_slice %17 {offsets = [0, 64], sizes = [64, 32], strides = [1, 1]} : vector<64x96xf32> to vector<64x32xf32>
    %c0_17 = arith.constant 0 : index
    %c0_18 = arith.constant 0 : index
    %23 = vector.load %arg2[%c0_17, %c0_18] : memref<64x4xf32, #tpu.memory_space<vmem>>, vector<64x4xf32>
    %c0_19 = arith.constant 0 : index
    %c0_20 = arith.constant 0 : index
    %24 = vector.load %arg8[%c0_19, %c0_20] : memref<4x96xf32, #tpu.memory_space<vmem>>, vector<4x96xf32>
    %cst_21 = arith.constant dense<0.000000e+00> : vector<64x96xf32>
    %25 = tpu.matmul %23, %24, %cst_21 {dimension_numbers = #tpu.dot_dimension_numbers<[1], [0], [0], [1], [0, 0, 1, 1], [], []>} : vector<64x4xf32>, vector<4x96xf32>, vector<64x96xf32> -> vector<64x96xf32>
    %c0_22 = arith.constant 0 : index
    %c0_23 = arith.constant 0 : index
    %26 = vector.load %arg9[%c0_22, %c0_23] : memref<1x96xf32, #tpu.memory_space<vmem>>, vector<1x96xf32>
    %27 = vector.broadcast %26 : vector<1x96xf32> to vector<64x96xf32>
    %28 = arith.addf %25, %27 : vector<64x96xf32>
    %29 = vector.extract_strided_slice %28 {offsets = [0, 0], sizes = [64, 64], strides = [1, 1]} : vector<64x96xf32> to vector<64x64xf32>
    %30 = vector.extract_strided_slice %3 {offsets = [0, 0], sizes = [1, 64], strides = [1, 1]} : vector<1x96xf32> to vector<1x64xf32>
    %31 = vector.broadcast %30 : vector<1x64xf32> to vector<64x64xf32>
    %32 = arith.addf %29, %31 : vector<64x64xf32>
    %33 = vector.extract_strided_slice %28 {offsets = [0, 64], sizes = [64, 32], strides = [1, 1]} : vector<64x96xf32> to vector<64x32xf32>
    %cst_24 = arith.constant 0.000000e+00 : f32
    %34 = vector.broadcast %cst_24 : f32 to vector<8x32xf32>
    %35 = vector.extract_strided_slice %21 {offsets = [0, 0], sizes = [8, 64], strides = [1, 1]} : vector<64x64xf32> to vector<8x64xf32>
    %36 = vector.extract_strided_slice %22 {offsets = [0, 0], sizes = [8, 32], strides = [1, 1]} : vector<64x32xf32> to vector<8x32xf32>
    %cst_25 = arith.constant dense<0.000000e+00> : vector<8x96xf32>
    %37 = tpu.matmul %34, %0, %cst_25 {dimension_numbers = #tpu.dot_dimension_numbers<[1], [0], [0], [1], [0, 0, 1, 1], [], []>} : vector<8x32xf32>, vector<32x96xf32>, vector<8x96xf32> -> vector<8x96xf32>
    %38 = vector.extract_strided_slice %37 {offsets = [0, 0], sizes = [8, 64], strides = [1, 1]} : vector<8x96xf32> to vector<8x64xf32>
    %39 = arith.addf %35, %38 : vector<8x64xf32>
    %cst_26 = arith.constant 5.000000e-01 : f32
    %40 = vector.broadcast %cst_26 : f32 to vector<8x64xf32>
    %41 = arith.mulf %40, %39 : vector<8x64xf32>
    %42 = math.tanh %41 : vector<8x64xf32>
    %cst_27 = arith.constant 5.000000e-01 : f32
    %43 = vector.broadcast %cst_27 : f32 to vector<8x64xf32>
    %44 = arith.mulf %43, %42 : vector<8x64xf32>
    %cst_28 = arith.constant 5.000000e-01 : f32
    %45 = vector.broadcast %cst_28 : f32 to vector<8x64xf32>
    %46 = arith.addf %44, %45 : vector<8x64xf32>
    %47 = vector.extract_strided_slice %46 {offsets = [0, 0], sizes = [8, 32], strides = [1, 1]} : vector<8x64xf32> to vector<8x32xf32>
    %48 = vector.extract_strided_slice %46 {offsets = [0, 32], sizes = [8, 32], strides = [1, 1]} : vector<8x64xf32> to vector<8x32xf32>
    %49 = vector.extract_strided_slice %37 {offsets = [0, 64], sizes = [8, 32], strides = [1, 1]} : vector<8x96xf32> to vector<8x32xf32>
    %50 = vector.broadcast %4 : vector<1x32xf32> to vector<8x32xf32>
    %51 = arith.addf %49, %50 : vector<8x32xf32>
    %52 = arith.mulf %47, %51 : vector<8x32xf32>
    %53 = arith.addf %36, %52 : vector<8x32xf32>
    %54 = math.tanh %53 : vector<8x32xf32>
    %cst_29 = arith.constant 1.000000e+00 : f32
    %55 = vector.broadcast %cst_29 : f32 to vector<8x32xf32>
    %56 = arith.subf %55, %48 : vector<8x32xf32>
    %57 = arith.mulf %56, %54 : vector<8x32xf32>
    %58 = arith.mulf %48, %34 : vector<8x32xf32>
    %59 = arith.addf %57, %58 : vector<8x32xf32>
    %60 = vector.extract_strided_slice %21 {offsets = [8, 0], sizes = [8, 64], strides = [1, 1]} : vector<64x64xf32> to vector<8x64xf32>
    %61 = vector.extract_strided_slice %22 {offsets = [8, 0], sizes = [8, 32], strides = [1, 1]} : vector<64x32xf32> to vector<8x32xf32>
    %cst_30 = arith.constant dense<0.000000e+00> : vector<8x96xf32>
    %62 = tpu.matmul %59, %0, %cst_30 {dimension_numbers = #tpu.dot_dimension_numbers<[1], [0], [0], [1], [0, 0, 1, 1], [], []>} : vector<8x32xf32>, vector<32x96xf32>, vector<8x96xf32> -> vector<8x96xf32>
    %63 = vector.extract_strided_slice %62 {offsets = [0, 0], sizes = [8, 64], strides = [1, 1]} : vector<8x96xf32> to vector<8x64xf32>
    %64 = arith.addf %60, %63 : vector<8x64xf32>
    %cst_31 = arith.constant 5.000000e-01 : f32
    %65 = vector.broadcast %cst_31 : f32 to vector<8x64xf32>
    %66 = arith.mulf %65, %64 : vector<8x64xf32>
    %67 = math.tanh %66 : vector<8x64xf32>
    %cst_32 = arith.constant 5.000000e-01 : f32
    %68 = vector.broadcast %cst_32 : f32 to vector<8x64xf32>
    %69 = arith.mulf %68, %67 : vector<8x64xf32>
    %cst_33 = arith.constant 5.000000e-01 : f32
    %70 = vector.broadcast %cst_33 : f32 to vector<8x64xf32>
    %71 = arith.addf %69, %70 : vector<8x64xf32>
    %72 = vector.extract_strided_slice %71 {offsets = [0, 0], sizes = [8, 32], strides = [1, 1]} : vector<8x64xf32> to vector<8x32xf32>
    %73 = vector.extract_strided_slice %71 {offsets = [0, 32], sizes = [8, 32], strides = [1, 1]} : vector<8x64xf32> to vector<8x32xf32>
    %74 = vector.extract_strided_slice %62 {offsets = [0, 64], sizes = [8, 32], strides = [1, 1]} : vector<8x96xf32> to vector<8x32xf32>
    %75 = vector.broadcast %4 : vector<1x32xf32> to vector<8x32xf32>
    %76 = arith.addf %74, %75 : vector<8x32xf32>
    %77 = arith.mulf %72, %76 : vector<8x32xf32>
    %78 = arith.addf %61, %77 : vector<8x32xf32>
    %79 = math.tanh %78 : vector<8x32xf32>
    %cst_34 = arith.constant 1.000000e+00 : f32
    %80 = vector.broadcast %cst_34 : f32 to vector<8x32xf32>
    %81 = arith.subf %80, %73 : vector<8x32xf32>
    %82 = arith.mulf %81, %79 : vector<8x32xf32>
    %83 = arith.mulf %73, %59 : vector<8x32xf32>
    %84 = arith.addf %82, %83 : vector<8x32xf32>
    %85 = vector.extract_strided_slice %21 {offsets = [16, 0], sizes = [8, 64], strides = [1, 1]} : vector<64x64xf32> to vector<8x64xf32>
    %86 = vector.extract_strided_slice %22 {offsets = [16, 0], sizes = [8, 32], strides = [1, 1]} : vector<64x32xf32> to vector<8x32xf32>
    %cst_35 = arith.constant dense<0.000000e+00> : vector<8x96xf32>
    %87 = tpu.matmul %84, %0, %cst_35 {dimension_numbers = #tpu.dot_dimension_numbers<[1], [0], [0], [1], [0, 0, 1, 1], [], []>} : vector<8x32xf32>, vector<32x96xf32>, vector<8x96xf32> -> vector<8x96xf32>
    %88 = vector.extract_strided_slice %87 {offsets = [0, 0], sizes = [8, 64], strides = [1, 1]} : vector<8x96xf32> to vector<8x64xf32>
    %89 = arith.addf %85, %88 : vector<8x64xf32>
    %cst_36 = arith.constant 5.000000e-01 : f32
    %90 = vector.broadcast %cst_36 : f32 to vector<8x64xf32>
    %91 = arith.mulf %90, %89 : vector<8x64xf32>
    %92 = math.tanh %91 : vector<8x64xf32>
    %cst_37 = arith.constant 5.000000e-01 : f32
    %93 = vector.broadcast %cst_37 : f32 to vector<8x64xf32>
    %94 = arith.mulf %93, %92 : vector<8x64xf32>
    %cst_38 = arith.constant 5.000000e-01 : f32
    %95 = vector.broadcast %cst_38 : f32 to vector<8x64xf32>
    %96 = arith.addf %94, %95 : vector<8x64xf32>
    %97 = vector.extract_strided_slice %96 {offsets = [0, 0], sizes = [8, 32], strides = [1, 1]} : vector<8x64xf32> to vector<8x32xf32>
    %98 = vector.extract_strided_slice %96 {offsets = [0, 32], sizes = [8, 32], strides = [1, 1]} : vector<8x64xf32> to vector<8x32xf32>
    %99 = vector.extract_strided_slice %87 {offsets = [0, 64], sizes = [8, 32], strides = [1, 1]} : vector<8x96xf32> to vector<8x32xf32>
    %100 = vector.broadcast %4 : vector<1x32xf32> to vector<8x32xf32>
    %101 = arith.addf %99, %100 : vector<8x32xf32>
    %102 = arith.mulf %97, %101 : vector<8x32xf32>
    %103 = arith.addf %86, %102 : vector<8x32xf32>
    %104 = math.tanh %103 : vector<8x32xf32>
    %cst_39 = arith.constant 1.000000e+00 : f32
    %105 = vector.broadcast %cst_39 : f32 to vector<8x32xf32>
    %106 = arith.subf %105, %98 : vector<8x32xf32>
    %107 = arith.mulf %106, %104 : vector<8x32xf32>
    %108 = arith.mulf %98, %84 : vector<8x32xf32>
    %109 = arith.addf %107, %108 : vector<8x32xf32>
    %110 = vector.extract_strided_slice %21 {offsets = [24, 0], sizes = [8, 64], strides = [1, 1]} : vector<64x64xf32> to vector<8x64xf32>
    %111 = vector.extract_strided_slice %22 {offsets = [24, 0], sizes = [8, 32], strides = [1, 1]} : vector<64x32xf32> to vector<8x32xf32>
    %cst_40 = arith.constant dense<0.000000e+00> : vector<8x96xf32>
    %112 = tpu.matmul %109, %0, %cst_40 {dimension_numbers = #tpu.dot_dimension_numbers<[1], [0], [0], [1], [0, 0, 1, 1], [], []>} : vector<8x32xf32>, vector<32x96xf32>, vector<8x96xf32> -> vector<8x96xf32>
    %113 = vector.extract_strided_slice %112 {offsets = [0, 0], sizes = [8, 64], strides = [1, 1]} : vector<8x96xf32> to vector<8x64xf32>
    %114 = arith.addf %110, %113 : vector<8x64xf32>
    %cst_41 = arith.constant 5.000000e-01 : f32
    %115 = vector.broadcast %cst_41 : f32 to vector<8x64xf32>
    %116 = arith.mulf %115, %114 : vector<8x64xf32>
    %117 = math.tanh %116 : vector<8x64xf32>
    %cst_42 = arith.constant 5.000000e-01 : f32
    %118 = vector.broadcast %cst_42 : f32 to vector<8x64xf32>
    %119 = arith.mulf %118, %117 : vector<8x64xf32>
    %cst_43 = arith.constant 5.000000e-01 : f32
    %120 = vector.broadcast %cst_43 : f32 to vector<8x64xf32>
    %121 = arith.addf %119, %120 : vector<8x64xf32>
    %122 = vector.extract_strided_slice %121 {offsets = [0, 0], sizes = [8, 32], strides = [1, 1]} : vector<8x64xf32> to vector<8x32xf32>
    %123 = vector.extract_strided_slice %121 {offsets = [0, 32], sizes = [8, 32], strides = [1, 1]} : vector<8x64xf32> to vector<8x32xf32>
    %124 = vector.extract_strided_slice %112 {offsets = [0, 64], sizes = [8, 32], strides = [1, 1]} : vector<8x96xf32> to vector<8x32xf32>
    %125 = vector.broadcast %4 : vector<1x32xf32> to vector<8x32xf32>
    %126 = arith.addf %124, %125 : vector<8x32xf32>
    %127 = arith.mulf %122, %126 : vector<8x32xf32>
    %128 = arith.addf %111, %127 : vector<8x32xf32>
    %129 = math.tanh %128 : vector<8x32xf32>
    %cst_44 = arith.constant 1.000000e+00 : f32
    %130 = vector.broadcast %cst_44 : f32 to vector<8x32xf32>
    %131 = arith.subf %130, %123 : vector<8x32xf32>
    %132 = arith.mulf %131, %129 : vector<8x32xf32>
    %133 = arith.mulf %123, %109 : vector<8x32xf32>
    %134 = arith.addf %132, %133 : vector<8x32xf32>
    %135 = vector.extract_strided_slice %21 {offsets = [32, 0], sizes = [8, 64], strides = [1, 1]} : vector<64x64xf32> to vector<8x64xf32>
    %136 = vector.extract_strided_slice %22 {offsets = [32, 0], sizes = [8, 32], strides = [1, 1]} : vector<64x32xf32> to vector<8x32xf32>
    %cst_45 = arith.constant dense<0.000000e+00> : vector<8x96xf32>
    %137 = tpu.matmul %134, %0, %cst_45 {dimension_numbers = #tpu.dot_dimension_numbers<[1], [0], [0], [1], [0, 0, 1, 1], [], []>} : vector<8x32xf32>, vector<32x96xf32>, vector<8x96xf32> -> vector<8x96xf32>
    %138 = vector.extract_strided_slice %137 {offsets = [0, 0], sizes = [8, 64], strides = [1, 1]} : vector<8x96xf32> to vector<8x64xf32>
    %139 = arith.addf %135, %138 : vector<8x64xf32>
    %cst_46 = arith.constant 5.000000e-01 : f32
    %140 = vector.broadcast %cst_46 : f32 to vector<8x64xf32>
    %141 = arith.mulf %140, %139 : vector<8x64xf32>
    %142 = math.tanh %141 : vector<8x64xf32>
    %cst_47 = arith.constant 5.000000e-01 : f32
    %143 = vector.broadcast %cst_47 : f32 to vector<8x64xf32>
    %144 = arith.mulf %143, %142 : vector<8x64xf32>
    %cst_48 = arith.constant 5.000000e-01 : f32
    %145 = vector.broadcast %cst_48 : f32 to vector<8x64xf32>
    %146 = arith.addf %144, %145 : vector<8x64xf32>
    %147 = vector.extract_strided_slice %146 {offsets = [0, 0], sizes = [8, 32], strides = [1, 1]} : vector<8x64xf32> to vector<8x32xf32>
    %148 = vector.extract_strided_slice %146 {offsets = [0, 32], sizes = [8, 32], strides = [1, 1]} : vector<8x64xf32> to vector<8x32xf32>
    %149 = vector.extract_strided_slice %137 {offsets = [0, 64], sizes = [8, 32], strides = [1, 1]} : vector<8x96xf32> to vector<8x32xf32>
    %150 = vector.broadcast %4 : vector<1x32xf32> to vector<8x32xf32>
    %151 = arith.addf %149, %150 : vector<8x32xf32>
    %152 = arith.mulf %147, %151 : vector<8x32xf32>
    %153 = arith.addf %136, %152 : vector<8x32xf32>
    %154 = math.tanh %153 : vector<8x32xf32>
    %cst_49 = arith.constant 1.000000e+00 : f32
    %155 = vector.broadcast %cst_49 : f32 to vector<8x32xf32>
    %156 = arith.subf %155, %148 : vector<8x32xf32>
    %157 = arith.mulf %156, %154 : vector<8x32xf32>
    %158 = arith.mulf %148, %134 : vector<8x32xf32>
    %159 = arith.addf %157, %158 : vector<8x32xf32>
    %160 = vector.extract_strided_slice %21 {offsets = [40, 0], sizes = [8, 64], strides = [1, 1]} : vector<64x64xf32> to vector<8x64xf32>
    %161 = vector.extract_strided_slice %22 {offsets = [40, 0], sizes = [8, 32], strides = [1, 1]} : vector<64x32xf32> to vector<8x32xf32>
    %cst_50 = arith.constant dense<0.000000e+00> : vector<8x96xf32>
    %162 = tpu.matmul %159, %0, %cst_50 {dimension_numbers = #tpu.dot_dimension_numbers<[1], [0], [0], [1], [0, 0, 1, 1], [], []>} : vector<8x32xf32>, vector<32x96xf32>, vector<8x96xf32> -> vector<8x96xf32>
    %163 = vector.extract_strided_slice %162 {offsets = [0, 0], sizes = [8, 64], strides = [1, 1]} : vector<8x96xf32> to vector<8x64xf32>
    %164 = arith.addf %160, %163 : vector<8x64xf32>
    %cst_51 = arith.constant 5.000000e-01 : f32
    %165 = vector.broadcast %cst_51 : f32 to vector<8x64xf32>
    %166 = arith.mulf %165, %164 : vector<8x64xf32>
    %167 = math.tanh %166 : vector<8x64xf32>
    %cst_52 = arith.constant 5.000000e-01 : f32
    %168 = vector.broadcast %cst_52 : f32 to vector<8x64xf32>
    %169 = arith.mulf %168, %167 : vector<8x64xf32>
    %cst_53 = arith.constant 5.000000e-01 : f32
    %170 = vector.broadcast %cst_53 : f32 to vector<8x64xf32>
    %171 = arith.addf %169, %170 : vector<8x64xf32>
    %172 = vector.extract_strided_slice %171 {offsets = [0, 0], sizes = [8, 32], strides = [1, 1]} : vector<8x64xf32> to vector<8x32xf32>
    %173 = vector.extract_strided_slice %171 {offsets = [0, 32], sizes = [8, 32], strides = [1, 1]} : vector<8x64xf32> to vector<8x32xf32>
    %174 = vector.extract_strided_slice %162 {offsets = [0, 64], sizes = [8, 32], strides = [1, 1]} : vector<8x96xf32> to vector<8x32xf32>
    %175 = vector.broadcast %4 : vector<1x32xf32> to vector<8x32xf32>
    %176 = arith.addf %174, %175 : vector<8x32xf32>
    %177 = arith.mulf %172, %176 : vector<8x32xf32>
    %178 = arith.addf %161, %177 : vector<8x32xf32>
    %179 = math.tanh %178 : vector<8x32xf32>
    %cst_54 = arith.constant 1.000000e+00 : f32
    %180 = vector.broadcast %cst_54 : f32 to vector<8x32xf32>
    %181 = arith.subf %180, %173 : vector<8x32xf32>
    %182 = arith.mulf %181, %179 : vector<8x32xf32>
    %183 = arith.mulf %173, %159 : vector<8x32xf32>
    %184 = arith.addf %182, %183 : vector<8x32xf32>
    %185 = vector.extract_strided_slice %21 {offsets = [48, 0], sizes = [8, 64], strides = [1, 1]} : vector<64x64xf32> to vector<8x64xf32>
    %186 = vector.extract_strided_slice %22 {offsets = [48, 0], sizes = [8, 32], strides = [1, 1]} : vector<64x32xf32> to vector<8x32xf32>
    %cst_55 = arith.constant dense<0.000000e+00> : vector<8x96xf32>
    %187 = tpu.matmul %184, %0, %cst_55 {dimension_numbers = #tpu.dot_dimension_numbers<[1], [0], [0], [1], [0, 0, 1, 1], [], []>} : vector<8x32xf32>, vector<32x96xf32>, vector<8x96xf32> -> vector<8x96xf32>
    %188 = vector.extract_strided_slice %187 {offsets = [0, 0], sizes = [8, 64], strides = [1, 1]} : vector<8x96xf32> to vector<8x64xf32>
    %189 = arith.addf %185, %188 : vector<8x64xf32>
    %cst_56 = arith.constant 5.000000e-01 : f32
    %190 = vector.broadcast %cst_56 : f32 to vector<8x64xf32>
    %191 = arith.mulf %190, %189 : vector<8x64xf32>
    %192 = math.tanh %191 : vector<8x64xf32>
    %cst_57 = arith.constant 5.000000e-01 : f32
    %193 = vector.broadcast %cst_57 : f32 to vector<8x64xf32>
    %194 = arith.mulf %193, %192 : vector<8x64xf32>
    %cst_58 = arith.constant 5.000000e-01 : f32
    %195 = vector.broadcast %cst_58 : f32 to vector<8x64xf32>
    %196 = arith.addf %194, %195 : vector<8x64xf32>
    %197 = vector.extract_strided_slice %196 {offsets = [0, 0], sizes = [8, 32], strides = [1, 1]} : vector<8x64xf32> to vector<8x32xf32>
    %198 = vector.extract_strided_slice %196 {offsets = [0, 32], sizes = [8, 32], strides = [1, 1]} : vector<8x64xf32> to vector<8x32xf32>
    %199 = vector.extract_strided_slice %187 {offsets = [0, 64], sizes = [8, 32], strides = [1, 1]} : vector<8x96xf32> to vector<8x32xf32>
    %200 = vector.broadcast %4 : vector<1x32xf32> to vector<8x32xf32>
    %201 = arith.addf %199, %200 : vector<8x32xf32>
    %202 = arith.mulf %197, %201 : vector<8x32xf32>
    %203 = arith.addf %186, %202 : vector<8x32xf32>
    %204 = math.tanh %203 : vector<8x32xf32>
    %cst_59 = arith.constant 1.000000e+00 : f32
    %205 = vector.broadcast %cst_59 : f32 to vector<8x32xf32>
    %206 = arith.subf %205, %198 : vector<8x32xf32>
    %207 = arith.mulf %206, %204 : vector<8x32xf32>
    %208 = arith.mulf %198, %184 : vector<8x32xf32>
    %209 = arith.addf %207, %208 : vector<8x32xf32>
    %210 = vector.extract_strided_slice %21 {offsets = [56, 0], sizes = [8, 64], strides = [1, 1]} : vector<64x64xf32> to vector<8x64xf32>
    %211 = vector.extract_strided_slice %22 {offsets = [56, 0], sizes = [8, 32], strides = [1, 1]} : vector<64x32xf32> to vector<8x32xf32>
    %cst_60 = arith.constant dense<0.000000e+00> : vector<8x96xf32>
    %212 = tpu.matmul %209, %0, %cst_60 {dimension_numbers = #tpu.dot_dimension_numbers<[1], [0], [0], [1], [0, 0, 1, 1], [], []>} : vector<8x32xf32>, vector<32x96xf32>, vector<8x96xf32> -> vector<8x96xf32>
    %213 = vector.extract_strided_slice %212 {offsets = [0, 0], sizes = [8, 64], strides = [1, 1]} : vector<8x96xf32> to vector<8x64xf32>
    %214 = arith.addf %210, %213 : vector<8x64xf32>
    %cst_61 = arith.constant 5.000000e-01 : f32
    %215 = vector.broadcast %cst_61 : f32 to vector<8x64xf32>
    %216 = arith.mulf %215, %214 : vector<8x64xf32>
    %217 = math.tanh %216 : vector<8x64xf32>
    %cst_62 = arith.constant 5.000000e-01 : f32
    %218 = vector.broadcast %cst_62 : f32 to vector<8x64xf32>
    %219 = arith.mulf %218, %217 : vector<8x64xf32>
    %cst_63 = arith.constant 5.000000e-01 : f32
    %220 = vector.broadcast %cst_63 : f32 to vector<8x64xf32>
    %221 = arith.addf %219, %220 : vector<8x64xf32>
    %222 = vector.extract_strided_slice %221 {offsets = [0, 0], sizes = [8, 32], strides = [1, 1]} : vector<8x64xf32> to vector<8x32xf32>
    %223 = vector.extract_strided_slice %221 {offsets = [0, 32], sizes = [8, 32], strides = [1, 1]} : vector<8x64xf32> to vector<8x32xf32>
    %224 = vector.extract_strided_slice %212 {offsets = [0, 64], sizes = [8, 32], strides = [1, 1]} : vector<8x96xf32> to vector<8x32xf32>
    %225 = vector.broadcast %4 : vector<1x32xf32> to vector<8x32xf32>
    %226 = arith.addf %224, %225 : vector<8x32xf32>
    %227 = arith.mulf %222, %226 : vector<8x32xf32>
    %228 = arith.addf %211, %227 : vector<8x32xf32>
    %229 = math.tanh %228 : vector<8x32xf32>
    %cst_64 = arith.constant 1.000000e+00 : f32
    %230 = vector.broadcast %cst_64 : f32 to vector<8x32xf32>
    %231 = arith.subf %230, %223 : vector<8x32xf32>
    %232 = arith.mulf %231, %229 : vector<8x32xf32>
    %233 = arith.mulf %223, %209 : vector<8x32xf32>
    %234 = arith.addf %232, %233 : vector<8x32xf32>
    %235 = vector.extract_strided_slice %32 {offsets = [0, 0], sizes = [8, 64], strides = [1, 1]} : vector<64x64xf32> to vector<8x64xf32>
    %236 = vector.extract_strided_slice %33 {offsets = [0, 0], sizes = [8, 32], strides = [1, 1]} : vector<64x32xf32> to vector<8x32xf32>
    %cst_65 = arith.constant dense<0.000000e+00> : vector<8x96xf32>
    %237 = tpu.matmul %234, %1, %cst_65 {dimension_numbers = #tpu.dot_dimension_numbers<[1], [0], [0], [1], [0, 0, 1, 1], [], []>} : vector<8x32xf32>, vector<32x96xf32>, vector<8x96xf32> -> vector<8x96xf32>
    %238 = vector.extract_strided_slice %237 {offsets = [0, 0], sizes = [8, 64], strides = [1, 1]} : vector<8x96xf32> to vector<8x64xf32>
    %239 = arith.addf %235, %238 : vector<8x64xf32>
    %cst_66 = arith.constant 5.000000e-01 : f32
    %240 = vector.broadcast %cst_66 : f32 to vector<8x64xf32>
    %241 = arith.mulf %240, %239 : vector<8x64xf32>
    %242 = math.tanh %241 : vector<8x64xf32>
    %cst_67 = arith.constant 5.000000e-01 : f32
    %243 = vector.broadcast %cst_67 : f32 to vector<8x64xf32>
    %244 = arith.mulf %243, %242 : vector<8x64xf32>
    %cst_68 = arith.constant 5.000000e-01 : f32
    %245 = vector.broadcast %cst_68 : f32 to vector<8x64xf32>
    %246 = arith.addf %244, %245 : vector<8x64xf32>
    %247 = vector.extract_strided_slice %246 {offsets = [0, 0], sizes = [8, 32], strides = [1, 1]} : vector<8x64xf32> to vector<8x32xf32>
    %248 = vector.extract_strided_slice %246 {offsets = [0, 32], sizes = [8, 32], strides = [1, 1]} : vector<8x64xf32> to vector<8x32xf32>
    %249 = vector.extract_strided_slice %237 {offsets = [0, 64], sizes = [8, 32], strides = [1, 1]} : vector<8x96xf32> to vector<8x32xf32>
    %250 = vector.broadcast %5 : vector<1x32xf32> to vector<8x32xf32>
    %251 = arith.addf %249, %250 : vector<8x32xf32>
    %252 = arith.mulf %247, %251 : vector<8x32xf32>
    %253 = arith.addf %236, %252 : vector<8x32xf32>
    %254 = math.tanh %253 : vector<8x32xf32>
    %cst_69 = arith.constant 1.000000e+00 : f32
    %255 = vector.broadcast %cst_69 : f32 to vector<8x32xf32>
    %256 = arith.subf %255, %248 : vector<8x32xf32>
    %257 = arith.mulf %256, %254 : vector<8x32xf32>
    %258 = arith.mulf %248, %234 : vector<8x32xf32>
    %259 = arith.addf %257, %258 : vector<8x32xf32>
    %c0_70 = arith.constant 0 : index
    %c0_71 = arith.constant 0 : index
    %260 = vector.load %arg15[%c0_70, %c0_71] : memref<64x32xf32, #tpu.memory_space<vmem>>, vector<8x32xf32>
    tpu.vector_store %arg15[%c0_70, %c0_71], %259 {strides = array<i32>} : memref<64x32xf32, #tpu.memory_space<vmem>>, vector<8x32xf32>,
    %261 = vector.extract_strided_slice %32 {offsets = [8, 0], sizes = [8, 64], strides = [1, 1]} : vector<64x64xf32> to vector<8x64xf32>
    %262 = vector.extract_strided_slice %33 {offsets = [8, 0], sizes = [8, 32], strides = [1, 1]} : vector<64x32xf32> to vector<8x32xf32>
    %cst_72 = arith.constant dense<0.000000e+00> : vector<8x96xf32>
    %263 = tpu.matmul %259, %1, %cst_72 {dimension_numbers = #tpu.dot_dimension_numbers<[1], [0], [0], [1], [0, 0, 1, 1], [], []>} : vector<8x32xf32>, vector<32x96xf32>, vector<8x96xf32> -> vector<8x96xf32>
    %264 = vector.extract_strided_slice %263 {offsets = [0, 0], sizes = [8, 64], strides = [1, 1]} : vector<8x96xf32> to vector<8x64xf32>
    %265 = arith.addf %261, %264 : vector<8x64xf32>
    %cst_73 = arith.constant 5.000000e-01 : f32
    %266 = vector.broadcast %cst_73 : f32 to vector<8x64xf32>
    %267 = arith.mulf %266, %265 : vector<8x64xf32>
    %268 = math.tanh %267 : vector<8x64xf32>
    %cst_74 = arith.constant 5.000000e-01 : f32
    %269 = vector.broadcast %cst_74 : f32 to vector<8x64xf32>
    %270 = arith.mulf %269, %268 : vector<8x64xf32>
    %cst_75 = arith.constant 5.000000e-01 : f32
    %271 = vector.broadcast %cst_75 : f32 to vector<8x64xf32>
    %272 = arith.addf %270, %271 : vector<8x64xf32>
    %273 = vector.extract_strided_slice %272 {offsets = [0, 0], sizes = [8, 32], strides = [1, 1]} : vector<8x64xf32> to vector<8x32xf32>
    %274 = vector.extract_strided_slice %272 {offsets = [0, 32], sizes = [8, 32], strides = [1, 1]} : vector<8x64xf32> to vector<8x32xf32>
    %275 = vector.extract_strided_slice %263 {offsets = [0, 64], sizes = [8, 32], strides = [1, 1]} : vector<8x96xf32> to vector<8x32xf32>
    %276 = vector.broadcast %5 : vector<1x32xf32> to vector<8x32xf32>
    %277 = arith.addf %275, %276 : vector<8x32xf32>
    %278 = arith.mulf %273, %277 : vector<8x32xf32>
    %279 = arith.addf %262, %278 : vector<8x32xf32>
    %280 = math.tanh %279 : vector<8x32xf32>
    %cst_76 = arith.constant 1.000000e+00 : f32
    %281 = vector.broadcast %cst_76 : f32 to vector<8x32xf32>
    %282 = arith.subf %281, %274 : vector<8x32xf32>
    %283 = arith.mulf %282, %280 : vector<8x32xf32>
    %284 = arith.mulf %274, %259 : vector<8x32xf32>
    %285 = arith.addf %283, %284 : vector<8x32xf32>
    %c8 = arith.constant 8 : index
    %c0_77 = arith.constant 0 : index
    %286 = vector.load %arg15[%c8, %c0_77] : memref<64x32xf32, #tpu.memory_space<vmem>>, vector<8x32xf32>
    tpu.vector_store %arg15[%c8, %c0_77], %285 {strides = array<i32>} : memref<64x32xf32, #tpu.memory_space<vmem>>, vector<8x32xf32>,
    %287 = vector.extract_strided_slice %32 {offsets = [16, 0], sizes = [8, 64], strides = [1, 1]} : vector<64x64xf32> to vector<8x64xf32>
    %288 = vector.extract_strided_slice %33 {offsets = [16, 0], sizes = [8, 32], strides = [1, 1]} : vector<64x32xf32> to vector<8x32xf32>
    %cst_78 = arith.constant dense<0.000000e+00> : vector<8x96xf32>
    %289 = tpu.matmul %285, %1, %cst_78 {dimension_numbers = #tpu.dot_dimension_numbers<[1], [0], [0], [1], [0, 0, 1, 1], [], []>} : vector<8x32xf32>, vector<32x96xf32>, vector<8x96xf32> -> vector<8x96xf32>
    %290 = vector.extract_strided_slice %289 {offsets = [0, 0], sizes = [8, 64], strides = [1, 1]} : vector<8x96xf32> to vector<8x64xf32>
    %291 = arith.addf %287, %290 : vector<8x64xf32>
    %cst_79 = arith.constant 5.000000e-01 : f32
    %292 = vector.broadcast %cst_79 : f32 to vector<8x64xf32>
    %293 = arith.mulf %292, %291 : vector<8x64xf32>
    %294 = math.tanh %293 : vector<8x64xf32>
    %cst_80 = arith.constant 5.000000e-01 : f32
    %295 = vector.broadcast %cst_80 : f32 to vector<8x64xf32>
    %296 = arith.mulf %295, %294 : vector<8x64xf32>
    %cst_81 = arith.constant 5.000000e-01 : f32
    %297 = vector.broadcast %cst_81 : f32 to vector<8x64xf32>
    %298 = arith.addf %296, %297 : vector<8x64xf32>
    %299 = vector.extract_strided_slice %298 {offsets = [0, 0], sizes = [8, 32], strides = [1, 1]} : vector<8x64xf32> to vector<8x32xf32>
    %300 = vector.extract_strided_slice %298 {offsets = [0, 32], sizes = [8, 32], strides = [1, 1]} : vector<8x64xf32> to vector<8x32xf32>
    %301 = vector.extract_strided_slice %289 {offsets = [0, 64], sizes = [8, 32], strides = [1, 1]} : vector<8x96xf32> to vector<8x32xf32>
    %302 = vector.broadcast %5 : vector<1x32xf32> to vector<8x32xf32>
    %303 = arith.addf %301, %302 : vector<8x32xf32>
    %304 = arith.mulf %299, %303 : vector<8x32xf32>
    %305 = arith.addf %288, %304 : vector<8x32xf32>
    %306 = math.tanh %305 : vector<8x32xf32>
    %cst_82 = arith.constant 1.000000e+00 : f32
    %307 = vector.broadcast %cst_82 : f32 to vector<8x32xf32>
    %308 = arith.subf %307, %300 : vector<8x32xf32>
    %309 = arith.mulf %308, %306 : vector<8x32xf32>
    %310 = arith.mulf %300, %285 : vector<8x32xf32>
    %311 = arith.addf %309, %310 : vector<8x32xf32>
    %c16 = arith.constant 16 : index
    %c0_83 = arith.constant 0 : index
    %312 = vector.load %arg15[%c16, %c0_83] : memref<64x32xf32, #tpu.memory_space<vmem>>, vector<8x32xf32>
    tpu.vector_store %arg15[%c16, %c0_83], %311 {strides = array<i32>} : memref<64x32xf32, #tpu.memory_space<vmem>>, vector<8x32xf32>,
    %313 = vector.extract_strided_slice %32 {offsets = [24, 0], sizes = [8, 64], strides = [1, 1]} : vector<64x64xf32> to vector<8x64xf32>
    %314 = vector.extract_strided_slice %33 {offsets = [24, 0], sizes = [8, 32], strides = [1, 1]} : vector<64x32xf32> to vector<8x32xf32>
    %cst_84 = arith.constant dense<0.000000e+00> : vector<8x96xf32>
    %315 = tpu.matmul %311, %1, %cst_84 {dimension_numbers = #tpu.dot_dimension_numbers<[1], [0], [0], [1], [0, 0, 1, 1], [], []>} : vector<8x32xf32>, vector<32x96xf32>, vector<8x96xf32> -> vector<8x96xf32>
    %316 = vector.extract_strided_slice %315 {offsets = [0, 0], sizes = [8, 64], strides = [1, 1]} : vector<8x96xf32> to vector<8x64xf32>
    %317 = arith.addf %313, %316 : vector<8x64xf32>
    %cst_85 = arith.constant 5.000000e-01 : f32
    %318 = vector.broadcast %cst_85 : f32 to vector<8x64xf32>
    %319 = arith.mulf %318, %317 : vector<8x64xf32>
    %320 = math.tanh %319 : vector<8x64xf32>
    %cst_86 = arith.constant 5.000000e-01 : f32
    %321 = vector.broadcast %cst_86 : f32 to vector<8x64xf32>
    %322 = arith.mulf %321, %320 : vector<8x64xf32>
    %cst_87 = arith.constant 5.000000e-01 : f32
    %323 = vector.broadcast %cst_87 : f32 to vector<8x64xf32>
    %324 = arith.addf %322, %323 : vector<8x64xf32>
    %325 = vector.extract_strided_slice %324 {offsets = [0, 0], sizes = [8, 32], strides = [1, 1]} : vector<8x64xf32> to vector<8x32xf32>
    %326 = vector.extract_strided_slice %324 {offsets = [0, 32], sizes = [8, 32], strides = [1, 1]} : vector<8x64xf32> to vector<8x32xf32>
    %327 = vector.extract_strided_slice %315 {offsets = [0, 64], sizes = [8, 32], strides = [1, 1]} : vector<8x96xf32> to vector<8x32xf32>
    %328 = vector.broadcast %5 : vector<1x32xf32> to vector<8x32xf32>
    %329 = arith.addf %327, %328 : vector<8x32xf32>
    %330 = arith.mulf %325, %329 : vector<8x32xf32>
    %331 = arith.addf %314, %330 : vector<8x32xf32>
    %332 = math.tanh %331 : vector<8x32xf32>
    %cst_88 = arith.constant 1.000000e+00 : f32
    %333 = vector.broadcast %cst_88 : f32 to vector<8x32xf32>
    %334 = arith.subf %333, %326 : vector<8x32xf32>
    %335 = arith.mulf %334, %332 : vector<8x32xf32>
    %336 = arith.mulf %326, %311 : vector<8x32xf32>
    %337 = arith.addf %335, %336 : vector<8x32xf32>
    %c24 = arith.constant 24 : index
    %c0_89 = arith.constant 0 : index
    %338 = vector.load %arg15[%c24, %c0_89] : memref<64x32xf32, #tpu.memory_space<vmem>>, vector<8x32xf32>
    tpu.vector_store %arg15[%c24, %c0_89], %337 {strides = array<i32>} : memref<64x32xf32, #tpu.memory_space<vmem>>, vector<8x32xf32>,
    %339 = vector.extract_strided_slice %32 {offsets = [32, 0], sizes = [8, 64], strides = [1, 1]} : vector<64x64xf32> to vector<8x64xf32>
    %340 = vector.extract_strided_slice %33 {offsets = [32, 0], sizes = [8, 32], strides = [1, 1]} : vector<64x32xf32> to vector<8x32xf32>
    %cst_90 = arith.constant dense<0.000000e+00> : vector<8x96xf32>
    %341 = tpu.matmul %337, %1, %cst_90 {dimension_numbers = #tpu.dot_dimension_numbers<[1], [0], [0], [1], [0, 0, 1, 1], [], []>} : vector<8x32xf32>, vector<32x96xf32>, vector<8x96xf32> -> vector<8x96xf32>
    %342 = vector.extract_strided_slice %341 {offsets = [0, 0], sizes = [8, 64], strides = [1, 1]} : vector<8x96xf32> to vector<8x64xf32>
    %343 = arith.addf %339, %342 : vector<8x64xf32>
    %cst_91 = arith.constant 5.000000e-01 : f32
    %344 = vector.broadcast %cst_91 : f32 to vector<8x64xf32>
    %345 = arith.mulf %344, %343 : vector<8x64xf32>
    %346 = math.tanh %345 : vector<8x64xf32>
    %cst_92 = arith.constant 5.000000e-01 : f32
    %347 = vector.broadcast %cst_92 : f32 to vector<8x64xf32>
    %348 = arith.mulf %347, %346 : vector<8x64xf32>
    %cst_93 = arith.constant 5.000000e-01 : f32
    %349 = vector.broadcast %cst_93 : f32 to vector<8x64xf32>
    %350 = arith.addf %348, %349 : vector<8x64xf32>
    %351 = vector.extract_strided_slice %350 {offsets = [0, 0], sizes = [8, 32], strides = [1, 1]} : vector<8x64xf32> to vector<8x32xf32>
    %352 = vector.extract_strided_slice %350 {offsets = [0, 32], sizes = [8, 32], strides = [1, 1]} : vector<8x64xf32> to vector<8x32xf32>
    %353 = vector.extract_strided_slice %341 {offsets = [0, 64], sizes = [8, 32], strides = [1, 1]} : vector<8x96xf32> to vector<8x32xf32>
    %354 = vector.broadcast %5 : vector<1x32xf32> to vector<8x32xf32>
    %355 = arith.addf %353, %354 : vector<8x32xf32>
    %356 = arith.mulf %351, %355 : vector<8x32xf32>
    %357 = arith.addf %340, %356 : vector<8x32xf32>
    %358 = math.tanh %357 : vector<8x32xf32>
    %cst_94 = arith.constant 1.000000e+00 : f32
    %359 = vector.broadcast %cst_94 : f32 to vector<8x32xf32>
    %360 = arith.subf %359, %352 : vector<8x32xf32>
    %361 = arith.mulf %360, %358 : vector<8x32xf32>
    %362 = arith.mulf %352, %337 : vector<8x32xf32>
    %363 = arith.addf %361, %362 : vector<8x32xf32>
    %c32 = arith.constant 32 : index
    %c0_95 = arith.constant 0 : index
    %364 = vector.load %arg15[%c32, %c0_95] : memref<64x32xf32, #tpu.memory_space<vmem>>, vector<8x32xf32>
    tpu.vector_store %arg15[%c32, %c0_95], %363 {strides = array<i32>} : memref<64x32xf32, #tpu.memory_space<vmem>>, vector<8x32xf32>,
    %365 = vector.extract_strided_slice %32 {offsets = [40, 0], sizes = [8, 64], strides = [1, 1]} : vector<64x64xf32> to vector<8x64xf32>
    %366 = vector.extract_strided_slice %33 {offsets = [40, 0], sizes = [8, 32], strides = [1, 1]} : vector<64x32xf32> to vector<8x32xf32>
    %cst_96 = arith.constant dense<0.000000e+00> : vector<8x96xf32>
    %367 = tpu.matmul %363, %1, %cst_96 {dimension_numbers = #tpu.dot_dimension_numbers<[1], [0], [0], [1], [0, 0, 1, 1], [], []>} : vector<8x32xf32>, vector<32x96xf32>, vector<8x96xf32> -> vector<8x96xf32>
    %368 = vector.extract_strided_slice %367 {offsets = [0, 0], sizes = [8, 64], strides = [1, 1]} : vector<8x96xf32> to vector<8x64xf32>
    %369 = arith.addf %365, %368 : vector<8x64xf32>
    %cst_97 = arith.constant 5.000000e-01 : f32
    %370 = vector.broadcast %cst_97 : f32 to vector<8x64xf32>
    %371 = arith.mulf %370, %369 : vector<8x64xf32>
    %372 = math.tanh %371 : vector<8x64xf32>
    %cst_98 = arith.constant 5.000000e-01 : f32
    %373 = vector.broadcast %cst_98 : f32 to vector<8x64xf32>
    %374 = arith.mulf %373, %372 : vector<8x64xf32>
    %cst_99 = arith.constant 5.000000e-01 : f32
    %375 = vector.broadcast %cst_99 : f32 to vector<8x64xf32>
    %376 = arith.addf %374, %375 : vector<8x64xf32>
    %377 = vector.extract_strided_slice %376 {offsets = [0, 0], sizes = [8, 32], strides = [1, 1]} : vector<8x64xf32> to vector<8x32xf32>
    %378 = vector.extract_strided_slice %376 {offsets = [0, 32], sizes = [8, 32], strides = [1, 1]} : vector<8x64xf32> to vector<8x32xf32>
    %379 = vector.extract_strided_slice %367 {offsets = [0, 64], sizes = [8, 32], strides = [1, 1]} : vector<8x96xf32> to vector<8x32xf32>
    %380 = vector.broadcast %5 : vector<1x32xf32> to vector<8x32xf32>
    %381 = arith.addf %379, %380 : vector<8x32xf32>
    %382 = arith.mulf %377, %381 : vector<8x32xf32>
    %383 = arith.addf %366, %382 : vector<8x32xf32>
    %384 = math.tanh %383 : vector<8x32xf32>
    %cst_100 = arith.constant 1.000000e+00 : f32
    %385 = vector.broadcast %cst_100 : f32 to vector<8x32xf32>
    %386 = arith.subf %385, %378 : vector<8x32xf32>
    %387 = arith.mulf %386, %384 : vector<8x32xf32>
    %388 = arith.mulf %378, %363 : vector<8x32xf32>
    %389 = arith.addf %387, %388 : vector<8x32xf32>
    %c40 = arith.constant 40 : index
    %c0_101 = arith.constant 0 : index
    %390 = vector.load %arg15[%c40, %c0_101] : memref<64x32xf32, #tpu.memory_space<vmem>>, vector<8x32xf32>
    tpu.vector_store %arg15[%c40, %c0_101], %389 {strides = array<i32>} : memref<64x32xf32, #tpu.memory_space<vmem>>, vector<8x32xf32>,
    %391 = vector.extract_strided_slice %32 {offsets = [48, 0], sizes = [8, 64], strides = [1, 1]} : vector<64x64xf32> to vector<8x64xf32>
    %392 = vector.extract_strided_slice %33 {offsets = [48, 0], sizes = [8, 32], strides = [1, 1]} : vector<64x32xf32> to vector<8x32xf32>
    %cst_102 = arith.constant dense<0.000000e+00> : vector<8x96xf32>
    %393 = tpu.matmul %389, %1, %cst_102 {dimension_numbers = #tpu.dot_dimension_numbers<[1], [0], [0], [1], [0, 0, 1, 1], [], []>} : vector<8x32xf32>, vector<32x96xf32>, vector<8x96xf32> -> vector<8x96xf32>
    %394 = vector.extract_strided_slice %393 {offsets = [0, 0], sizes = [8, 64], strides = [1, 1]} : vector<8x96xf32> to vector<8x64xf32>
    %395 = arith.addf %391, %394 : vector<8x64xf32>
    %cst_103 = arith.constant 5.000000e-01 : f32
    %396 = vector.broadcast %cst_103 : f32 to vector<8x64xf32>
    %397 = arith.mulf %396, %395 : vector<8x64xf32>
    %398 = math.tanh %397 : vector<8x64xf32>
    %cst_104 = arith.constant 5.000000e-01 : f32
    %399 = vector.broadcast %cst_104 : f32 to vector<8x64xf32>
    %400 = arith.mulf %399, %398 : vector<8x64xf32>
    %cst_105 = arith.constant 5.000000e-01 : f32
    %401 = vector.broadcast %cst_105 : f32 to vector<8x64xf32>
    %402 = arith.addf %400, %401 : vector<8x64xf32>
    %403 = vector.extract_strided_slice %402 {offsets = [0, 0], sizes = [8, 32], strides = [1, 1]} : vector<8x64xf32> to vector<8x32xf32>
    %404 = vector.extract_strided_slice %402 {offsets = [0, 32], sizes = [8, 32], strides = [1, 1]} : vector<8x64xf32> to vector<8x32xf32>
    %405 = vector.extract_strided_slice %393 {offsets = [0, 64], sizes = [8, 32], strides = [1, 1]} : vector<8x96xf32> to vector<8x32xf32>
    %406 = vector.broadcast %5 : vector<1x32xf32> to vector<8x32xf32>
    %407 = arith.addf %405, %406 : vector<8x32xf32>
    %408 = arith.mulf %403, %407 : vector<8x32xf32>
    %409 = arith.addf %392, %408 : vector<8x32xf32>
    %410 = math.tanh %409 : vector<8x32xf32>
    %cst_106 = arith.constant 1.000000e+00 : f32
    %411 = vector.broadcast %cst_106 : f32 to vector<8x32xf32>
    %412 = arith.subf %411, %404 : vector<8x32xf32>
    %413 = arith.mulf %412, %410 : vector<8x32xf32>
    %414 = arith.mulf %404, %389 : vector<8x32xf32>
    %415 = arith.addf %413, %414 : vector<8x32xf32>
    %c48 = arith.constant 48 : index
    %c0_107 = arith.constant 0 : index
    %416 = vector.load %arg15[%c48, %c0_107] : memref<64x32xf32, #tpu.memory_space<vmem>>, vector<8x32xf32>
    tpu.vector_store %arg15[%c48, %c0_107], %415 {strides = array<i32>} : memref<64x32xf32, #tpu.memory_space<vmem>>, vector<8x32xf32>,
    %417 = vector.extract_strided_slice %32 {offsets = [56, 0], sizes = [8, 64], strides = [1, 1]} : vector<64x64xf32> to vector<8x64xf32>
    %418 = vector.extract_strided_slice %33 {offsets = [56, 0], sizes = [8, 32], strides = [1, 1]} : vector<64x32xf32> to vector<8x32xf32>
    %cst_108 = arith.constant dense<0.000000e+00> : vector<8x96xf32>
    %419 = tpu.matmul %415, %1, %cst_108 {dimension_numbers = #tpu.dot_dimension_numbers<[1], [0], [0], [1], [0, 0, 1, 1], [], []>} : vector<8x32xf32>, vector<32x96xf32>, vector<8x96xf32> -> vector<8x96xf32>
    %420 = vector.extract_strided_slice %419 {offsets = [0, 0], sizes = [8, 64], strides = [1, 1]} : vector<8x96xf32> to vector<8x64xf32>
    %421 = arith.addf %417, %420 : vector<8x64xf32>
    %cst_109 = arith.constant 5.000000e-01 : f32
    %422 = vector.broadcast %cst_109 : f32 to vector<8x64xf32>
    %423 = arith.mulf %422, %421 : vector<8x64xf32>
    %424 = math.tanh %423 : vector<8x64xf32>
    %cst_110 = arith.constant 5.000000e-01 : f32
    %425 = vector.broadcast %cst_110 : f32 to vector<8x64xf32>
    %426 = arith.mulf %425, %424 : vector<8x64xf32>
    %cst_111 = arith.constant 5.000000e-01 : f32
    %427 = vector.broadcast %cst_111 : f32 to vector<8x64xf32>
    %428 = arith.addf %426, %427 : vector<8x64xf32>
    %429 = vector.extract_strided_slice %428 {offsets = [0, 0], sizes = [8, 32], strides = [1, 1]} : vector<8x64xf32> to vector<8x32xf32>
    %430 = vector.extract_strided_slice %428 {offsets = [0, 32], sizes = [8, 32], strides = [1, 1]} : vector<8x64xf32> to vector<8x32xf32>
    %431 = vector.extract_strided_slice %419 {offsets = [0, 64], sizes = [8, 32], strides = [1, 1]} : vector<8x96xf32> to vector<8x32xf32>
    %432 = vector.broadcast %5 : vector<1x32xf32> to vector<8x32xf32>
    %433 = arith.addf %431, %432 : vector<8x32xf32>
    %434 = arith.mulf %429, %433 : vector<8x32xf32>
    %435 = arith.addf %418, %434 : vector<8x32xf32>
    %436 = math.tanh %435 : vector<8x32xf32>
    %cst_112 = arith.constant 1.000000e+00 : f32
    %437 = vector.broadcast %cst_112 : f32 to vector<8x32xf32>
    %438 = arith.subf %437, %430 : vector<8x32xf32>
    %439 = arith.mulf %438, %436 : vector<8x32xf32>
    %440 = arith.mulf %430, %415 : vector<8x32xf32>
    %441 = arith.addf %439, %440 : vector<8x32xf32>
    %c56 = arith.constant 56 : index
    %c0_113 = arith.constant 0 : index
    %442 = vector.load %arg15[%c56, %c0_113] : memref<64x32xf32, #tpu.memory_space<vmem>>, vector<8x32xf32>
    tpu.vector_store %arg15[%c56, %c0_113], %441 {strides = array<i32>} : memref<64x32xf32, #tpu.memory_space<vmem>>, vector<8x32xf32>,
    %c0_114 = arith.constant 0 : index
    %c0_115 = arith.constant 0 : index
    %443 = vector.load %arg15[%c0_114, %c0_115] : memref<64x32xf32, #tpu.memory_space<vmem>>, vector<64x32xf32>
    %c0_116 = arith.constant 0 : index
    %c0_117 = arith.constant 0 : index
    %444 = vector.load %arg12[%c0_116, %c0_117] : memref<32x128xf32, #tpu.memory_space<vmem>>, vector<32x128xf32>
    %cst_118 = arith.constant dense<0.000000e+00> : vector<64x128xf32>
    %445 = tpu.matmul %443, %444, %cst_118 {dimension_numbers = #tpu.dot_dimension_numbers<[1], [0], [0], [1], [0, 0, 1, 1], [], []>} : vector<64x32xf32>, vector<32x128xf32>, vector<64x128xf32> -> vector<64x128xf32>
    %c0_119 = arith.constant 0 : index
    %c0_120 = arith.constant 0 : index
    %446 = vector.load %arg13[%c0_119, %c0_120] : memref<1x128xf32, #tpu.memory_space<vmem>>, vector<1x128xf32>
    %447 = vector.broadcast %446 : vector<1x128xf32> to vector<64x128xf32>
    %448 = arith.addf %445, %447 : vector<64x128xf32>
    %cst_121 = arith.constant dense<0xFF800000> : vector<64xf32>
    %449 = vector.multi_reduction <maximumf>, %448, %cst_121 [1] : vector<64x128xf32> to vector<64xf32>
    %450 = vector.shape_cast %449 : vector<64xf32> to vector<64x1xf32>
    %451 = vector.broadcast %450 : vector<64x1xf32> to vector<64x128xf32>
    %452 = arith.subf %448, %451 : vector<64x128xf32>
    %453 = math.exp %452 : vector<64x128xf32>
    %cst_122 = arith.constant dense<0.000000e+00> : vector<64xf32>
    %454 = vector.multi_reduction <add>, %453, %cst_122 [1] : vector<64x128xf32> to vector<64xf32>
    %455 = vector.shape_cast %454 : vector<64xf32> to vector<64x1xf32>
    %456 = tpu.reciprocal %455 : vector<64x1xf32> -> vector<64x1xf32>
    %457 = vector.broadcast %456 : vector<64x1xf32> to vector<64x128xf32>
    %458 = arith.mulf %453, %457 : vector<64x128xf32>
    %c0_123 = arith.constant 0 : index
    %c0_124 = arith.constant 0 : index
    %459 = vector.load %arg14[%c0_123, %c0_124] : memref<64x128xf32, #tpu.memory_space<vmem>>, vector<64x128xf32>
    tpu.vector_store %arg14[%c0_123, %c0_124], %458 {strides = array<i32>} : memref<64x128xf32, #tpu.memory_space<vmem>>, vector<64x128xf32>,
    return
  }
}

</mosaic_0001>

<llo_original>
// kernel: tpu_custom_call.1
$region0: #{tpu_custom_call.1}
  #allocation0 [shape = 'u32[]', space=smem, size = 0x4, offset = 0x4, fixed_abs, tag = 'smem constant byte address 0x4 - core index']
  #allocation1 [shape = 'u32[144,128]{1,0:T(1,128)}', space=vmem, size = 0x12000, scoped, tag = 'internal scratch']
  #allocation2 [shape = 'f32[64,32]{1,0:T(8,128)}', space=vmem, size = 0x8000, scoped, tag = 'scratch operand']
  %s0 = inlined_call_operand.vmem [shape: f32[64,112], index: 0, kind: input, shape index: {}]
  %s1 = inlined_call_operand.vmem [shape: f32[64,1], index: 1, kind: input, shape index: {}]
  %s2 = inlined_call_operand.vmem [shape: f32[64,4], index: 2, kind: input, shape index: {}]
  %s3 = inlined_call_operand.vmem [shape: f32[112,96], index: 3, kind: input, shape index: {}]
  %s4 = inlined_call_operand.vmem [shape: f32[1,96], index: 4, kind: input, shape index: {}]
  %s5 = inlined_call_operand.vmem [shape: f32[1,96], index: 5, kind: input, shape index: {}]
  %s6 = inlined_call_operand.vmem [shape: f32[32,96], index: 6, kind: input, shape index: {}]
  %s7 = inlined_call_operand.vmem [shape: f32[1,96], index: 7, kind: input, shape index: {}]
  %s8 = inlined_call_operand.vmem [shape: f32[4,96], index: 8, kind: input, shape index: {}]
  %s9 = inlined_call_operand.vmem [shape: f32[1,96], index: 9, kind: input, shape index: {}]
  %s10 = inlined_call_operand.vmem [shape: f32[32,96], index: 10, kind: input, shape index: {}]
  %s11 = inlined_call_operand.vmem [shape: f32[1,96], index: 11, kind: input, shape index: {}]
  %s12 = inlined_call_operand.vmem [shape: f32[32,128], index: 12, kind: input, shape index: {}]
  %s13 = inlined_call_operand.vmem [shape: f32[1,128], index: 13, kind: input, shape index: {}]
  %s14 = inlined_call_operand.hbm [shape: f32[64,128], index: 14, kind: output, shape index: {}]
  %s15 = sld [smem:[#allocation0]]
  $region66: #{tpu_custom_call.1} parent=0
    _
  %s17 = ssub.s32 1, %s15
  %s18 = scalar_select 0, %s17, %s15
  $region1: #{tpu_custom_call.1} parent=0
    #allocation3 [shape = 'u8[32768]{0}', space=vmem, size = 0x8000, scoped, tag = 'output window, operand 0, single buffered']
    #allocation4 [shape = 's32[1]{0}', space=sflag, size = 0x4, scoped, tag = 'scoped memory for tpu_custom_call.1']
    %19 = vsyncpa [#allocation4], 0
    // Predicated region
    $region2: #{tpu_custom_call.1} parent=1 // pred_check
      _
    $region3: #{tpu_custom_call.1} parent=1 // pred_check_branch
      %21 = sbr.rel (0) target = $region5
    $region4: #{tpu_custom_call.1} parent=1 // pred_region
      _
    $region5: #{tpu_custom_call.1} parent=1 // pred_fallthru
      _
    // Predicated region
    $region6: #{tpu_custom_call.1} parent=1 // pred_check
      _
    $region7: #{tpu_custom_call.1} parent=1 // pred_check_branch
      %23 = sbr.rel (0) target = $region9
    $region8: #{tpu_custom_call.1} parent=1 // pred_region
      _
    $region9: #{tpu_custom_call.1} parent=1 // pred_fallthru
      _
    // Predicated region
    $region10: #{tpu_custom_call.1} parent=1 // pred_check
      _
    $region11: #{tpu_custom_call.1} parent=1 // pred_check_branch
      %25 = sbr.rel (0) target = $region13
    $region12: #{tpu_custom_call.1} parent=1 // pred_region
      _
    $region13: #{tpu_custom_call.1} parent=1 // pred_fallthru
      _
    // Predicated region
    $region14: #{tpu_custom_call.1} parent=1 // pred_check
      _
    $region15: #{tpu_custom_call.1} parent=1 // pred_check_branch
      %27 = sbr.rel (0) target = $region17
    $region16: #{tpu_custom_call.1} parent=1 // pred_region
      _
    $region17: #{tpu_custom_call.1} parent=1 // pred_fallthru
      _
    // Predicated region
    $region18: #{tpu_custom_call.1} parent=1 // pred_check
      _
    $region19: #{tpu_custom_call.1} parent=1 // pred_check_branch
      %29 = sbr.rel (0) target = $region21
    $region20: #{tpu_custom_call.1} parent=1 // pred_region
      _
    $region21: #{tpu_custom_call.1} parent=1 // pred_fallthru
      _
    // Predicated region
    $region22: #{tpu_custom_call.1} parent=1 // pred_check
      _
    $region23: #{tpu_custom_call.1} parent=1 // pred_check_branch
      %31 = sbr.rel (0) target = $region25
    $region24: #{tpu_custom_call.1} parent=1 // pred_region
      _
    $region25: #{tpu_custom_call.1} parent=1 // pred_fallthru
      _
    // Predicated region
    $region26: #{tpu_custom_call.1} parent=1 // pred_check
      _
    $region27: #{tpu_custom_call.1} parent=1 // pred_check_branch
      %33 = sbr.rel (0) target = $region29
    $region28: #{tpu_custom_call.1} parent=1 // pred_region
      _
    $region29: #{tpu_custom_call.1} parent=1 // pred_fallthru
      _
    // Predicated region
    $region30: #{tpu_custom_call.1} parent=1 // pred_check
      _
    $region31: #{tpu_custom_call.1} parent=1 // pred_check_branch
      %35 = sbr.rel (0) target = $region33
    $region32: #{tpu_custom_call.1} parent=1 // pred_region
      _
    $region33: #{tpu_custom_call.1} parent=1 // pred_fallthru
      _
    // Predicated region
    $region34: #{tpu_custom_call.1} parent=1 // pred_check
      _
    $region35: #{tpu_custom_call.1} parent=1 // pred_check_branch
      %37 = sbr.rel (0) target = $region37
    $region36: #{tpu_custom_call.1} parent=1 // pred_region
      _
    $region37: #{tpu_custom_call.1} parent=1 // pred_fallthru
      _
    // Predicated region
    $region38: #{tpu_custom_call.1} parent=1 // pred_check
      _
    $region39: #{tpu_custom_call.1} parent=1 // pred_check_branch
      %39 = sbr.rel (0) target = $region41
    $region40: #{tpu_custom_call.1} parent=1 // pred_region
      _
    $region41: #{tpu_custom_call.1} parent=1 // pred_fallthru
      _
    // Predicated region
    $region42: #{tpu_custom_call.1} parent=1 // pred_check
      _
    $region43: #{tpu_custom_call.1} parent=1 // pred_check_branch
      %41 = sbr.rel (0) target = $region45
    $region44: #{tpu_custom_call.1} parent=1 // pred_region
      _
    $region45: #{tpu_custom_call.1} parent=1 // pred_fallthru
      _
    // Predicated region
    $region46: #{tpu_custom_call.1} parent=1 // pred_check
      _
    $region47: #{tpu_custom_call.1} parent=1 // pred_check_branch
      %43 = sbr.rel (0) target = $region49
    $region48: #{tpu_custom_call.1} parent=1 // pred_region
      _
    $region49: #{tpu_custom_call.1} parent=1 // pred_fallthru
      _
    // Predicated region
    $region50: #{tpu_custom_call.1} parent=1 // pred_check
      _
    $region51: #{tpu_custom_call.1} parent=1 // pred_check_branch
      %45 = sbr.rel (0) target = $region53
    $region52: #{tpu_custom_call.1} parent=1 // pred_region
      _
    $region53: #{tpu_custom_call.1} parent=1 // pred_fallthru
      _
    // Predicated region
    $region54: #{tpu_custom_call.1} parent=1 // pred_check
      _
    $region55: #{tpu_custom_call.1} parent=1 // pred_check_branch
      %47 = sbr.rel (0) target = $region57
    $region56: #{tpu_custom_call.1} parent=1 // pred_region
      _
    $region57: #{tpu_custom_call.1} parent=1 // pred_fallthru
      _
    %v48 = vld [vmem:[%s6] sm:$0xff]
    %v49 = vld [vmem:[%s6 + $0x8] sm:$0xff]
    %v50 = vld [vmem:[%s6 + $0x10] sm:$0xff]
    %v51 = vld [vmem:[%s6 + $0x18] sm:$0xff]
    %v52 = vld [vmem:[%s10] sm:$0xff]
    %v53 = vld [vmem:[%s10 + $0x8] sm:$0xff]
    %v54 = vld [vmem:[%s10 + $0x10] sm:$0xff]
    %v55 = vld [vmem:[%s10 + $0x18] sm:$0xff]
    %v56 = vld [vmem:[%s7] sm:$0x1]
    %v57 = vld [vmem:[%s11] sm:$0x1]
    %v58 = vld [vmem:[%s0] sm:$0xff]
    %v59 = vld [vmem:[%s0 + $0x8] sm:$0xff]
    %v60 = vld [vmem:[%s0 + $0x10] sm:$0xff]
    %v61 = vld [vmem:[%s0 + $0x18] sm:$0xff]
    %v62 = vld [vmem:[%s0 + $0x20] sm:$0xff]
    %v63 = vld [vmem:[%s0 + $0x28] sm:$0xff]
    %v64 = vld [vmem:[%s0 + $0x30] sm:$0xff]
    %v65 = vld [vmem:[%s0 + $0x38] sm:$0xff]
    %v66 = vld [vmem:[%s3] sm:$0xff]
    %v67 = vld [vmem:[%s3 + $0x8] sm:$0xff]
    %v68 = vld [vmem:[%s3 + $0x10] sm:$0xff]
    %v69 = vld [vmem:[%s3 + $0x18] sm:$0xff]
    %v70 = vld [vmem:[%s3 + $0x20] sm:$0xff]
    %v71 = vld [vmem:[%s3 + $0x28] sm:$0xff]
    %v72 = vld [vmem:[%s3 + $0x30] sm:$0xff]
    %v73 = vld [vmem:[%s3 + $0x38] sm:$0xff]
    %v74 = vld [vmem:[%s3 + $0x40] sm:$0xff]
    %v75 = vld [vmem:[%s3 + $0x48] sm:$0xff]
    %v76 = vld [vmem:[%s3 + $0x50] sm:$0xff]
    %v77 = vld [vmem:[%s3 + $0x58] sm:$0xff]
    %v78 = vld [vmem:[%s3 + $0x60] sm:$0xff]
    %v79 = vld [vmem:[%s3 + $0x68] sm:$0xff]
    %v80 = vld [vmem:[%s1] sm:$0xff]
    %v81 = vld [vmem:[%s1 + $0x8] sm:$0xff]
    %v82 = vld [vmem:[%s1 + $0x10] sm:$0xff]
    %v83 = vld [vmem:[%s1 + $0x18] sm:$0xff]
    %v84 = vld [vmem:[%s1 + $0x20] sm:$0xff]
    %v85 = vld [vmem:[%s1 + $0x28] sm:$0xff]
    %v86 = vld [vmem:[%s1 + $0x30] sm:$0xff]
    %v87 = vld [vmem:[%s1 + $0x38] sm:$0xff]
    %v88 = vld [vmem:[%s4] sm:$0x1]
    %90 = vset.pattern.permute.xlu0 0
    %91 = vperm.xlu0 %90, %v80
    %v92 = vpop.permute.xlu0 %91
    %95 = vset.pattern.permute.xlu0 0
    %96 = vperm.xlu0 %95, %v81
    %v97 = vpop.permute.xlu0 %96
    %100 = vset.pattern.permute.xlu0 0
    %101 = vperm.xlu0 %100, %v82
    %v102 = vpop.permute.xlu0 %101
    %105 = vset.pattern.permute.xlu0 0
    %106 = vperm.xlu0 %105, %v83
    %v107 = vpop.permute.xlu0 %106
    %110 = vset.pattern.permute.xlu0 0
    %111 = vperm.xlu0 %110, %v84
    %v112 = vpop.permute.xlu0 %111
    %115 = vset.pattern.permute.xlu0 0
    %116 = vperm.xlu0 %115, %v85
    %v117 = vpop.permute.xlu0 %116
    %120 = vset.pattern.permute.xlu0 0
    %121 = vperm.xlu0 %120, %v86
    %v122 = vpop.permute.xlu0 %121
    %125 = vset.pattern.permute.xlu0 0
    %126 = vperm.xlu0 %125, %v87
    %v127 = vpop.permute.xlu0 %126
    %v130 = vlaneseq
    %v131 = vshrl.u32 %v130, 7
    %v132 = vsub.s32 0, %v131
    %v133 = vrot.slane %v88, %v132
    %v135 = vmul.f32 %v92, %v133
    %v136 = vmul.f32 %v97, %v133
    %v137 = vmul.f32 %v102, %v133
    %v138 = vmul.f32 %v107, %v133
    %v139 = vmul.f32 %v112, %v133
    %v140 = vmul.f32 %v117, %v133
    %v141 = vmul.f32 %v122, %v133
    %v142 = vmul.f32 %v127, %v133
    %vm143 = vcmask 916480
    %v145 = vsel %vm143, %v58, 0
    %v148 = vsel %vm143, %v59, 0
    %v151 = vsel %vm143, %v60, 0
    %v154 = vsel %vm143, %v61, 0
    %v157 = vsel %vm143, %v62, 0
    %v160 = vsel %vm143, %v63, 0
    %v163 = vsel %vm143, %v64, 0
    %v166 = vsel %vm143, %v65, 0
    %168 = vmatprep.subr.mxu0 0.0
    %169 = vmatpush1.msra.mxu0 0.0
    %170 = vmatprep.subr.mxu0 0.0
    %171 = vmatpush1.msra.mxu0 0.0
    %172 = vmatprep.subr.mxu0 0.0
    %173 = vmatpush1.msra.mxu0 %v79
    %174 = vmatprep.subr.mxu0 0.0
    %175 = vmatpush1.msra.mxu0 %v78
    %176 = vmatprep.subr.mxu0 0.0
    %177 = vmatpush1.msra.mxu0 %v77
    %178 = vmatprep.subr.mxu0 0.0
    %179 = vmatpush1.msra.mxu0 %v76
    %180 = vmatprep.subr.mxu0 0.0
    %181 = vmatpush1.msra.mxu0 %v75
    %182 = vmatprep.subr.mxu0 0.0
    %183 = vmatpush1.msra.mxu0 %v74
    %184 = vmatprep.subr.mxu0 0.0
    %185 = vmatpush1.msra.mxu0 %v73
    %186 = vmatprep.subr.mxu0 0.0
    %187 = vmatpush1.msra.mxu0 %v72
    %188 = vmatprep.subr.mxu0 0.0
    %189 = vmatpush1.msra.mxu0 %v71
    %190 = vmatprep.subr.mxu0 0.0
    %191 = vmatpush1.msra.mxu0 %v70
    %192 = vmatprep.subr.mxu0 0.0
    %193 = vmatpush1.msra.mxu0 %v69
    %194 = vmatprep.subr.mxu0 0.0
    %195 = vmatpush1.msra.mxu0 %v68
    %196 = vmatprep.subr.mxu0 0.0
    %197 = vmatpush1.msra.mxu0 %v67
    %198 = vmatprep.subr.mxu0 0.0
    %199 = vmatpush1.msra.mxu0 %v66
    %200 = vmatprep.subr.mxu0 0.0
    %201 = vmatpush2.msra.mxu0 0.0
    %202 = vmatprep.subr.mxu0 0.0
    %203 = vmatpush2.msra.mxu0 0.0
    %204 = vmatprep.subr.mxu0 0.0
    %205 = vmatpush2.msra.mxu0 0.0
    %206 = vmatprep.subr.mxu0 0.0
    %207 = vmatpush2.msra.mxu0 0.0
    %208 = vmatprep.subr.mxu0 0.0
    %209 = vmatpush2.msra.mxu0 0.0
    %210 = vmatprep.subr.mxu0 0.0
    %211 = vmatpush2.msra.mxu0 0.0
    %212 = vmatprep.subr.mxu0 0.0
    %213 = vmatpush2.msra.mxu0 0.0
    %214 = vmatprep.subr.mxu0 0.0
    %215 = vmatpush2.msra.mxu0 0.0
    %216 = vmatprep.subr.mxu0 0.0
    %217 = vmatpush2.msra.mxu0 0.0
    %218 = vmatprep.subr.mxu0 0.0
    %219 = vmatpush2.msra.mxu0 0.0
    %220 = vmatprep.subr.mxu0 0.0
    %221 = vmatpush2.msra.mxu0 0.0
    %222 = vmatprep.subr.mxu0 0.0
    %223 = vmatpush2.msra.mxu0 0.0
    %224 = vmatprep.subr.mxu0 0.0
    %225 = vmatpush2.msra.mxu0 0.0
    %226 = vmatprep.subr.mxu0 0.0
    %227 = vmatpush2.msra.mxu0 0.0
    %228 = vmatprep.subr.mxu0 0.0
    %229 = vmatpush2.msra.mxu0 0.0
    %230 = vmatprep.subr.mxu0 0.0
    %231 = vmatpush2.msra.mxu0 0.0
    %232 = vmatprep.mubr.f32.mxu0 0.0
    %233 = vmatmul.mubr.f32.gmra.mxu0 %v145
    %v234 = vpop.f32.mrf.mxu0
    %v235 = vadd.f32 %v135, %v234
    %v236 = vpop.f32.mrf.mxu0
    %237 = vmatprep.mubr.f32.mxu0 0.0
    %238 = vmatmul.mubr.f32.gmra.mxu0 %v148
    %v239 = vpop.f32.mrf.mxu0
    %v240 = vadd.f32 %v136, %v239
    %v241 = vpop.f32.mrf.mxu0
    %242 = vmatprep.mubr.f32.mxu0 0.0
    %243 = vmatmul.mubr.f32.gmra.mxu0 %v151
    %v244 = vpop.f32.mrf.mxu0
    %v245 = vadd.f32 %v137, %v244
    %v246 = vpop.f32.mrf.mxu0
    %247 = vmatprep.mubr.f32.mxu0 0.0
    %248 = vmatmul.mubr.f32.gmra.mxu0 %v154
    %v249 = vpop.f32.mrf.mxu0
    %v250 = vadd.f32 %v138, %v249
    %v251 = vpop.f32.mrf.mxu0
    %252 = vmatprep.mubr.f32.mxu0 0.0
    %253 = vmatmul.mubr.f32.gmra.mxu0 %v157
    %v254 = vpop.f32.mrf.mxu0
    %v255 = vadd.f32 %v139, %v254
    %v256 = vpop.f32.mrf.mxu0
    %257 = vmatprep.mubr.f32.mxu0 0.0
    %258 = vmatmul.mubr.f32.gmra.mxu0 %v160
    %v259 = vpop.f32.mrf.mxu0
    %v260 = vadd.f32 %v140, %v259
    %v261 = vpop.f32.mrf.mxu0
    %262 = vmatprep.mubr.f32.mxu0 0.0
    %263 = vmatmul.mubr.f32.gmra.mxu0 %v163
    %v264 = vpop.f32.mrf.mxu0
    %v265 = vadd.f32 %v141, %v264
    %v266 = vpop.f32.mrf.mxu0
    %267 = vmatprep.mubr.f32.mxu0 0.0
    %268 = vmatmul.mubr.f32.gmra.mxu0 %v166
    %v269 = vpop.f32.mrf.mxu0
    %v270 = vadd.f32 %v142, %v269
    %v271 = vpop.f32.mrf.mxu0
    %272 = vdwg.mxu0
    %v273 = vld [vmem:[%s5] sm:$0x1]
    %v275 = vlaneseq
    %v276 = vshrl.u32 %v275, 7
    %v277 = vsub.s32 0, %v276
    %v278 = vrot.slane %v273, %v277
    %v280 = vadd.f32 %v235, %v278
    %v281 = vadd.f32 %v240, %v278
    %v282 = vadd.f32 %v245, %v278
    %v283 = vadd.f32 %v250, %v278
    %v284 = vadd.f32 %v255, %v278
    %v285 = vadd.f32 %v260, %v278
    %v286 = vadd.f32 %v265, %v278
    %v287 = vadd.f32 %v270, %v278
    %v289 = vlaneseq
    %v290 = vshrl.u32 %v289, 7
    %v291 = vsub.s32 0, %v290
    %v292 = vrot.slane %v56, %v291
    %v294 = vadd.f32 %v280, %v292
    %v295 = vadd.f32 %v281, %v292
    %v296 = vadd.f32 %v282, %v292
    %v297 = vadd.f32 %v283, %v292
    %v298 = vadd.f32 %v284, %v292
    %v299 = vadd.f32 %v285, %v292
    %v300 = vadd.f32 %v286, %v292
    %v301 = vadd.f32 %v287, %v292
    %v302 = vld [vmem:[%s2] sm:$0xff]
    %v303 = vld [vmem:[%s2 + $0x8] sm:$0xff]
    %v304 = vld [vmem:[%s2 + $0x10] sm:$0xff]
    %v305 = vld [vmem:[%s2 + $0x18] sm:$0xff]
    %v306 = vld [vmem:[%s2 + $0x20] sm:$0xff]
    %v307 = vld [vmem:[%s2 + $0x28] sm:$0xff]
    %v308 = vld [vmem:[%s2 + $0x30] sm:$0xff]
    %v309 = vld [vmem:[%s2 + $0x38] sm:$0xff]
    %v310 = vld [vmem:[%s8] sm:$0xf]
    %v311 = vld [vmem:[%s9] sm:$0x1]
    %v313 = vlaneseq
    %v314 = vshrl.u32 %v313, 7
    %v315 = vsub.s32 0, %v314
    %v316 = vrot.slane %v311, %v315
    %vm318 = vcmask 31744
    %v320 = vsel %vm318, %v302, 0
    %v323 = vsel %vm318, %v303, 0
    %v326 = vsel %vm318, %v304, 0
    %v329 = vsel %vm318, %v305, 0
    %v332 = vsel %vm318, %v306, 0
    %v335 = vsel %vm318, %v307, 0
    %v338 = vsel %vm318, %v308, 0
    %v341 = vsel %vm318, %v309, 0
    %vm343 = vcmask 1043456
    %v345 = vsel %vm343, %v310, 0
    %347 = vmatprep.subr.mxu0 0.0
    %348 = vmatpush1.msra.mxu0 0.0
    %349 = vmatprep.subr.mxu0 0.0
    %350 = vmatpush1.msra.mxu0 0.0
    %351 = vmatprep.subr.mxu0 0.0
    %352 = vmatpush1.msra.mxu0 0.0
    %353 = vmatprep.subr.mxu0 0.0
    %354 = vmatpush1.msra.mxu0 0.0
    %355 = vmatprep.subr.mxu0 0.0
    %356 = vmatpush1.msra.mxu0 0.0
    %357 = vmatprep.subr.mxu0 0.0
    %358 = vmatpush1.msra.mxu0 0.0
    %359 = vmatprep.subr.mxu0 0.0
    %360 = vmatpush1.msra.mxu0 0.0
    %361 = vmatprep.subr.mxu0 0.0
    %362 = vmatpush1.msra.mxu0 0.0
    %363 = vmatprep.subr.mxu0 0.0
    %364 = vmatpush1.msra.mxu0 0.0
    %365 = vmatprep.subr.mxu0 0.0
    %366 = vmatpush1.msra.mxu0 0.0
    %367 = vmatprep.subr.mxu0 0.0
    %368 = vmatpush1.msra.mxu0 0.0
    %369 = vmatprep.subr.mxu0 0.0
    %370 = vmatpush1.msra.mxu0 0.0
    %371 = vmatprep.subr.mxu0 0.0
    %372 = vmatpush1.msra.mxu0 0.0
    %373 = vmatprep.subr.mxu0 0.0
    %374 = vmatpush1.msra.mxu0 0.0
    %375 = vmatprep.subr.mxu0 0.0
    %376 = vmatpush1.msra.mxu0 0.0
    %377 = vmatprep.subr.mxu0 0.0
    %378 = vmatpush1.msra.mxu0 %v345
    %379 = vmatprep.subr.mxu0 0.0
    %380 = vmatpush2.msra.mxu0 0.0
    %381 = vmatprep.subr.mxu0 0.0
    %382 = vmatpush2.msra.mxu0 0.0
    %383 = vmatprep.subr.mxu0 0.0
    %384 = vmatpush2.msra.mxu0 0.0
    %385 = vmatprep.subr.mxu0 0.0
    %386 = vmatpush2.msra.mxu0 0.0
    %387 = vmatprep.subr.mxu0 0.0
    %388 = vmatpush2.msra.mxu0 0.0
    %389 = vmatprep.subr.mxu0 0.0
    %390 = vmatpush2.msra.mxu0 0.0
    %391 = vmatprep.subr.mxu0 0.0
    %392 = vmatpush2.msra.mxu0 0.0
    %393 = vmatprep.subr.mxu0 0.0
    %394 = vmatpush2.msra.mxu0 0.0
    %395 = vmatprep.subr.mxu0 0.0
    %396 = vmatpush2.msra.mxu0 0.0
    %397 = vmatprep.subr.mxu0 0.0
    %398 = vmatpush2.msra.mxu0 0.0
    %399 = vmatprep.subr.mxu0 0.0
    %400 = vmatpush2.msra.mxu0 0.0
    %401 = vmatprep.subr.mxu0 0.0
    %402 = vmatpush2.msra.mxu0 0.0
    %403 = vmatprep.subr.mxu0 0.0
    %404 = vmatpush2.msra.mxu0 0.0
    %405 = vmatprep.subr.mxu0 0.0
    %406 = vmatpush2.msra.mxu0 0.0
    %407 = vmatprep.subr.mxu0 0.0
    %408 = vmatpush2.msra.mxu0 0.0
    %409 = vmatprep.subr.mxu0 0.0
    %410 = vmatpush2.msra.mxu0 0.0
    %411 = vmatprep.mubr.f32.mxu0 0.0
    %412 = vmatmul.mubr.f32.gmra.mxu0 %v320
    %v413 = vpop.f32.mrf.mxu0
    %v414 = vadd.f32 %v316, %v413
    %v415 = vpop.f32.mrf.mxu0
    %416 = vmatprep.mubr.f32.mxu0 0.0
    %417 = vmatmul.mubr.f32.gmra.mxu0 %v323
    %v418 = vpop.f32.mrf.mxu0
    %v419 = vadd.f32 %v316, %v418
    %v420 = vpop.f32.mrf.mxu0
    %421 = vmatprep.mubr.f32.mxu0 0.0
    %422 = vmatmul.mubr.f32.gmra.mxu0 %v326
    %v423 = vpop.f32.mrf.mxu0
    %v424 = vadd.f32 %v316, %v423
    %v425 = vpop.f32.mrf.mxu0
    %426 = vmatprep.mubr.f32.mxu0 0.0
    %427 = vmatmul.mubr.f32.gmra.mxu0 %v329
    %v428 = vpop.f32.mrf.mxu0
    %v429 = vadd.f32 %v316, %v428
    %v430 = vpop.f32.mrf.mxu0
    %431 = vmatprep.mubr.f32.mxu0 0.0
    %432 = vmatmul.mubr.f32.gmra.mxu0 %v332
    %v433 = vpop.f32.mrf.mxu0
    %v434 = vadd.f32 %v316, %v433
    %v435 = vpop.f32.mrf.mxu0
    %436 = vmatprep.mubr.f32.mxu0 0.0
    %437 = vmatmul.mubr.f32.gmra.mxu0 %v335
    %v438 = vpop.f32.mrf.mxu0
    %v439 = vadd.f32 %v316, %v438
    %v440 = vpop.f32.mrf.mxu0
    %441 = vmatprep.mubr.f32.mxu0 0.0
    %442 = vmatmul.mubr.f32.gmra.mxu0 %v338
    %v443 = vpop.f32.mrf.mxu0
    %v444 = vadd.f32 %v316, %v443
    %v445 = vpop.f32.mrf.mxu0
    %446 = vmatprep.mubr.f32.mxu0 0.0
    %447 = vmatmul.mubr.f32.gmra.mxu0 %v341
    %v448 = vpop.f32.mrf.mxu0
    %v449 = vadd.f32 %v316, %v448
    %v450 = vpop.f32.mrf.mxu0
    %451 = vdwg.mxu0
    %v453 = vlaneseq
    %v454 = vshrl.u32 %v453, 7
    %v455 = vsub.s32 0, %v454
    %v456 = vrot.slane %v57, %v455
    %v458 = vadd.f32 %v414, %v456
    %v459 = vadd.f32 %v419, %v456
    %v460 = vadd.f32 %v424, %v456
    %v461 = vadd.f32 %v429, %v456
    %v462 = vadd.f32 %v434, %v456
    %v463 = vadd.f32 %v439, %v456
    %v464 = vadd.f32 %v444, %v456
    %v465 = vadd.f32 %v449, %v456
    %vm466 = vcmask 261120
    %v468 = vsel %vm466, 0.0, 0
    %470 = vmatprep.subr.mxu0 0.0
    %471 = vmatpush1.msra.mxu0 0.0
    %472 = vmatprep.subr.mxu0 0.0
    %473 = vmatpush1.msra.mxu0 0.0
    %474 = vmatprep.subr.mxu0 0.0
    %475 = vmatpush1.msra.mxu0 0.0
    %476 = vmatprep.subr.mxu0 0.0
    %477 = vmatpush1.msra.mxu0 0.0
    %478 = vmatprep.subr.mxu0 0.0
    %479 = vmatpush1.msra.mxu0 0.0
    %480 = vmatprep.subr.mxu0 0.0
    %481 = vmatpush1.msra.mxu0 0.0
    %482 = vmatprep.subr.mxu0 0.0
    %483 = vmatpush1.msra.mxu0 0.0
    %484 = vmatprep.subr.mxu0 0.0
    %485 = vmatpush1.msra.mxu0 0.0
    %486 = vmatprep.subr.mxu0 0.0
    %487 = vmatpush1.msra.mxu0 0.0
    %488 = vmatprep.subr.mxu0 0.0
    %489 = vmatpush1.msra.mxu0 0.0
    %490 = vmatprep.subr.mxu0 0.0
    %491 = vmatpush1.msra.mxu0 0.0
    %492 = vmatprep.subr.mxu0 0.0
    %493 = vmatpush1.msra.mxu0 0.0
    %494 = vmatprep.subr.mxu0 0.0
    %495 = vmatpush1.msra.mxu0 %v51
    %496 = vmatprep.subr.mxu0 0.0
    %497 = vmatpush1.msra.mxu0 %v50
    %498 = vmatprep.subr.mxu0 0.0
    %499 = vmatpush1.msra.mxu0 %v49
    %500 = vmatprep.subr.mxu0 0.0
    %501 = vmatpush1.msra.mxu0 %v48
    %502 = vmatprep.subr.mxu0 0.0
    %503 = vmatpush2.msra.mxu0 0.0
    %504 = vmatprep.subr.mxu0 0.0
    %505 = vmatpush2.msra.mxu0 0.0
    %506 = vmatprep.subr.mxu0 0.0
    %507 = vmatpush2.msra.mxu0 0.0
    %508 = vmatprep.subr.mxu0 0.0
    %509 = vmatpush2.msra.mxu0 0.0
    %510 = vmatprep.subr.mxu0 0.0
    %511 = vmatpush2.msra.mxu0 0.0
    %512 = vmatprep.subr.mxu0 0.0
    %513 = vmatpush2.msra.mxu0 0.0
    %514 = vmatprep.subr.mxu0 0.0
    %515 = vmatpush2.msra.mxu0 0.0
    %516 = vmatprep.subr.mxu0 0.0
    %517 = vmatpush2.msra.mxu0 0.0
    %518 = vmatprep.subr.mxu0 0.0
    %519 = vmatpush2.msra.mxu0 0.0
    %520 = vmatprep.subr.mxu0 0.0
    %521 = vmatpush2.msra.mxu0 0.0
    %522 = vmatprep.subr.mxu0 0.0
    %523 = vmatpush2.msra.mxu0 0.0
    %524 = vmatprep.subr.mxu0 0.0
    %525 = vmatpush2.msra.mxu0 0.0
    %526 = vmatprep.subr.mxu0 0.0
    %527 = vmatpush2.msra.mxu0 0.0
    %528 = vmatprep.subr.mxu0 0.0
    %529 = vmatpush2.msra.mxu0 0.0
    %530 = vmatprep.subr.mxu0 0.0
    %531 = vmatpush2.msra.mxu0 0.0
    %532 = vmatprep.subr.mxu0 0.0
    %533 = vmatpush2.msra.mxu0 0.0
    %534 = vmatprep.mubr.f32.mxu0 0.0
    %535 = vmatmul.mubr.f32.gmra.mxu0 %v468
    %v536 = vpop.f32.mrf.mxu0
    %v537 = vadd.f32 0.0, %v536
    %v538 = vpop.f32.mrf.mxu0
    %539 = vdwg.mxu0
    %v540 = vadd.f32 %v294, %v537
    %v541 = vmul.f32 %v540, 0.5
    %v542 = vtanh.pop %v541
    %v543 = vmul.f32 %v542, 0.5
    %v544 = vadd.f32 %v543, 0.5
    %v545 = vadd.f32 %v537, %v292
    %547 = vrot.lane.b32.xlu0 %v545, 64
    %v548 = vpop.permute.xlu0 %547
    %v550 = vmul.f32 %v544, %v548
    %552 = vrot.lane.b32.xlu0 %v550, 64
    %v553 = vpop.permute.xlu0 %552
    %v555 = vadd.f32 %v280, %v553
    %v556 = vtanh.pop %v555
    %v557 = vsub.f32 1.0, %v544
    %559 = vrot.lane.b32.xlu0 %v556, 96
    %v560 = vpop.permute.xlu0 %559
    %v562 = vmul.f32 %v557, %v560
    %v563 = vmul.f32 %v544, 0.0
    %v564 = vadd.f32 %v562, %v563
    %566 = vrot.lane.b32.xlu0 %v564, 96
    %v567 = vpop.permute.xlu0 %566
    %v568 = vsel %vm466, %v567, 0
    %570 = vmatprep.subr.mxu0 0.0
    %571 = vmatpush1.msra.mxu0 0.0
    %572 = vmatprep.subr.mxu0 0.0
    %573 = vmatpush1.msra.mxu0 0.0
    %574 = vmatprep.subr.mxu0 0.0
    %575 = vmatpush1.msra.mxu0 0.0
    %576 = vmatprep.subr.mxu0 0.0
    %577 = vmatpush1.msra.mxu0 0.0
    %578 = vmatprep.subr.mxu0 0.0
    %579 = vmatpush1.msra.mxu0 0.0
    %580 = vmatprep.subr.mxu0 0.0
    %581 = vmatpush1.msra.mxu0 0.0
    %582 = vmatprep.subr.mxu0 0.0
    %583 = vmatpush1.msra.mxu0 0.0
    %584 = vmatprep.subr.mxu0 0.0
    %585 = vmatpush1.msra.mxu0 0.0
    %586 = vmatprep.subr.mxu0 0.0
    %587 = vmatpush1.msra.mxu0 0.0
    %588 = vmatprep.subr.mxu0 0.0
    %589 = vmatpush1.msra.mxu0 0.0
    %590 = vmatprep.subr.mxu0 0.0
    %591 = vmatpush1.msra.mxu0 0.0
    %592 = vmatprep.subr.mxu0 0.0
    %593 = vmatpush1.msra.mxu0 0.0
    %594 = vmatprep.subr.mxu0 0.0
    %595 = vmatpush1.msra.mxu0 %v51
    %596 = vmatprep.subr.mxu0 0.0
    %597 = vmatpush1.msra.mxu0 %v50
    %598 = vmatprep.subr.mxu0 0.0
    %599 = vmatpush1.msra.mxu0 %v49
    %600 = vmatprep.subr.mxu0 0.0
    %601 = vmatpush1.msra.mxu0 %v48
    %602 = vmatprep.subr.mxu0 0.0
    %603 = vmatpush2.msra.mxu0 0.0
    %604 = vmatprep.subr.mxu0 0.0
    %605 = vmatpush2.msra.mxu0 0.0
    %606 = vmatprep.subr.mxu0 0.0
    %607 = vmatpush2.msra.mxu0 0.0
    %608 = vmatprep.subr.mxu0 0.0
    %609 = vmatpush2.msra.mxu0 0.0
    %610 = vmatprep.subr.mxu0 0.0
    %611 = vmatpush2.msra.mxu0 0.0
    %612 = vmatprep.subr.mxu0 0.0
    %613 = vmatpush2.msra.mxu0 0.0
    %614 = vmatprep.subr.mxu0 0.0
    %615 = vmatpush2.msra.mxu0 0.0
    %616 = vmatprep.subr.mxu0 0.0
    %617 = vmatpush2.msra.mxu0 0.0
    %618 = vmatprep.subr.mxu0 0.0
    %619 = vmatpush2.msra.mxu0 0.0
    %620 = vmatprep.subr.mxu0 0.0
    %621 = vmatpush2.msra.mxu0 0.0
    %622 = vmatprep.subr.mxu0 0.0
    %623 = vmatpush2.msra.mxu0 0.0
    %624 = vmatprep.subr.mxu0 0.0
    %625 = vmatpush2.msra.mxu0 0.0
    %626 = vmatprep.subr.mxu0 0.0
    %627 = vmatpush2.msra.mxu0 0.0
    %628 = vmatprep.subr.mxu0 0.0
    %629 = vmatpush2.msra.mxu0 0.0
    %630 = vmatprep.subr.mxu0 0.0
    %631 = vmatpush2.msra.mxu0 0.0
    %632 = vmatprep.subr.mxu0 0.0
    %633 = vmatpush2.msra.mxu0 0.0
    %634 = vmatprep.mubr.f32.mxu0 0.0
    %635 = vmatmul.mubr.f32.gmra.mxu0 %v568
    %v636 = vpop.f32.mrf.mxu0
    %v637 = vadd.f32 0.0, %v636
    %v638 = vpop.f32.mrf.mxu0
    %639 = vdwg.mxu0
    %v640 = vadd.f32 %v295, %v637
    %v641 = vmul.f32 %v640, 0.5
    %v642 = vtanh.pop %v641
    %v643 = vmul.f32 %v642, 0.5
    %v644 = vadd.f32 %v643, 0.5
    %v645 = vadd.f32 %v637, %v292
    %647 = vrot.lane.b32.xlu0 %v645, 64
    %v648 = vpop.permute.xlu0 %647
    %v650 = vmul.f32 %v644, %v648
    %652 = vrot.lane.b32.xlu0 %v650, 64
    %v653 = vpop.permute.xlu0 %652
    %v655 = vadd.f32 %v281, %v653
    %v656 = vtanh.pop %v655
    %v657 = vsub.f32 1.0, %v644
    %659 = vrot.lane.b32.xlu0 %v656, 96
    %v660 = vpop.permute.xlu0 %659
    %v662 = vmul.f32 %v657, %v660
    %v663 = vmul.f32 %v644, %v564
    %v664 = vadd.f32 %v662, %v663
    %666 = vrot.lane.b32.xlu0 %v664, 96
    %v667 = vpop.permute.xlu0 %666
    %v668 = vsel %vm466, %v667, 0
    %670 = vmatprep.subr.mxu0 0.0
    %671 = vmatpush1.msra.mxu0 0.0
    %672 = vmatprep.subr.mxu0 0.0
    %673 = vmatpush1.msra.mxu0 0.0
    %674 = vmatprep.subr.mxu0 0.0
    %675 = vmatpush1.msra.mxu0 0.0
    %676 = vmatprep.subr.mxu0 0.0
    %677 = vmatpush1.msra.mxu0 0.0
    %678 = vmatprep.subr.mxu0 0.0
    %679 = vmatpush1.msra.mxu0 0.0
    %680 = vmatprep.subr.mxu0 0.0
    %681 = vmatpush1.msra.mxu0 0.0
    %682 = vmatprep.subr.mxu0 0.0
    %683 = vmatpush1.msra.mxu0 0.0
    %684 = vmatprep.subr.mxu0 0.0
    %685 = vmatpush1.msra.mxu0 0.0
    %686 = vmatprep.subr.mxu0 0.0
    %687 = vmatpush1.msra.mxu0 0.0
    %688 = vmatprep.subr.mxu0 0.0
    %689 = vmatpush1.msra.mxu0 0.0
    %690 = vmatprep.subr.mxu0 0.0
    %691 = vmatpush1.msra.mxu0 0.0
    %692 = vmatprep.subr.mxu0 0.0
    %693 = vmatpush1.msra.mxu0 0.0
    %694 = vmatprep.subr.mxu0 0.0
    %695 = vmatpush1.msra.mxu0 %v51
    %696 = vmatprep.subr.mxu0 0.0
    %697 = vmatpush1.msra.mxu0 %v50
    %698 = vmatprep.subr.mxu0 0.0
    %699 = vmatpush1.msra.mxu0 %v49
    %700 = vmatprep.subr.mxu0 0.0
    %701 = vmatpush1.msra.mxu0 %v48
    %702 = vmatprep.subr.mxu0 0.0
    %703 = vmatpush2.msra.mxu0 0.0
    %704 = vmatprep.subr.mxu0 0.0
    %705 = vmatpush2.msra.mxu0 0.0
    %706 = vmatprep.subr.mxu0 0.0
    %707 = vmatpush2.msra.mxu0 0.0
    %708 = vmatprep.subr.mxu0 0.0
    %709 = vmatpush2.msra.mxu0 0.0
    %710 = vmatprep.subr.mxu0 0.0
    %711 = vmatpush2.msra.mxu0 0.0
    %712 = vmatprep.subr.mxu0 0.0
    %713 = vmatpush2.msra.mxu0 0.0
    %714 = vmatprep.subr.mxu0 0.0
    %715 = vmatpush2.msra.mxu0 0.0
    %716 = vmatprep.subr.mxu0 0.0
    %717 = vmatpush2.msra.mxu0 0.0
    %718 = vmatprep.subr.mxu0 0.0
    %719 = vmatpush2.msra.mxu0 0.0
    %720 = vmatprep.subr.mxu0 0.0
    %721 = vmatpush2.msra.mxu0 0.0
    %722 = vmatprep.subr.mxu0 0.0
    %723 = vmatpush2.msra.mxu0 0.0
    %724 = vmatprep.subr.mxu0 0.0
    %725 = vmatpush2.msra.mxu0 0.0
    %726 = vmatprep.subr.mxu0 0.0
    %727 = vmatpush2.msra.mxu0 0.0
    %728 = vmatprep.subr.mxu0 0.0
    %729 = vmatpush2.msra.mxu0 0.0
    %730 = vmatprep.subr.mxu0 0.0
    %731 = vmatpush2.msra.mxu0 0.0
    %732 = vmatprep.subr.mxu0 0.0
    %733 = vmatpush2.msra.mxu0 0.0
    %734 = vmatprep.mubr.f32.mxu0 0.0
    %735 = vmatmul.mubr.f32.gmra.mxu0 %v668
    %v736 = vpop.f32.mrf.mxu0
    %v737 = vadd.f32 0.0, %v736
    %v738 = vpop.f32.mrf.mxu0
    %739 = vdwg.mxu0
    %v740 = vadd.f32 %v296, %v737
    %v741 = vmul.f32 %v740, 0.5
    %v742 = vtanh.pop %v741
    %v743 = vmul.f32 %v742, 0.5
    %v744 = vadd.f32 %v743, 0.5
    %v745 = vadd.f32 %v737, %v292
    %747 = vrot.lane.b32.xlu0 %v745, 64
    %v748 = vpop.permute.xlu0 %747
    %v750 = vmul.f32 %v744, %v748
    %752 = vrot.lane.b32.xlu0 %v750, 64
    %v753 = vpop.permute.xlu0 %752
    %v755 = vadd.f32 %v282, %v753
    %v756 = vtanh.pop %v755
    %v757 = vsub.f32 1.0, %v744
    %759 = vrot.lane.b32.xlu0 %v756, 96
    %v760 = vpop.permute.xlu0 %759
    %v762 = vmul.f32 %v757, %v760
    %v763 = vmul.f32 %v744, %v664
    %v764 = vadd.f32 %v762, %v763
    %766 = vrot.lane.b32.xlu0 %v764, 96
    %v767 = vpop.permute.xlu0 %766
    %v768 = vsel %vm466, %v767, 0
    %770 = vmatprep.subr.mxu0 0.0
    %771 = vmatpush1.msra.mxu0 0.0
    %772 = vmatprep.subr.mxu0 0.0
    %773 = vmatpush1.msra.mxu0 0.0
    %774 = vmatprep.subr.mxu0 0.0
    %775 = vmatpush1.msra.mxu0 0.0
    %776 = vmatprep.subr.mxu0 0.0
    %777 = vmatpush1.msra.mxu0 0.0
    %778 = vmatprep.subr.mxu0 0.0
    %779 = vmatpush1.msra.mxu0 0.0
    %780 = vmatprep.subr.mxu0 0.0
    %781 = vmatpush1.msra.mxu0 0.0
    %782 = vmatprep.subr.mxu0 0.0
    %783 = vmatpush1.msra.mxu0 0.0
    %784 = vmatprep.subr.mxu0 0.0
    %785 = vmatpush1.msra.mxu0 0.0
    %786 = vmatprep.subr.mxu0 0.0
    %787 = vmatpush1.msra.mxu0 0.0
    %788 = vmatprep.subr.mxu0 0.0
    %789 = vmatpush1.msra.mxu0 0.0
    %790 = vmatprep.subr.mxu0 0.0
    %791 = vmatpush1.msra.mxu0 0.0
    %792 = vmatprep.subr.mxu0 0.0
    %793 = vmatpush1.msra.mxu0 0.0
    %794 = vmatprep.subr.mxu0 0.0
    %795 = vmatpush1.msra.mxu0 %v51
    %796 = vmatprep.subr.mxu0 0.0
    %797 = vmatpush1.msra.mxu0 %v50
    %798 = vmatprep.subr.mxu0 0.0
    %799 = vmatpush1.msra.mxu0 %v49
    %800 = vmatprep.subr.mxu0 0.0
    %801 = vmatpush1.msra.mxu0 %v48
    %802 = vmatprep.subr.mxu0 0.0
    %803 = vmatpush2.msra.mxu0 0.0
    %804 = vmatprep.subr.mxu0 0.0
    %805 = vmatpush2.msra.mxu0 0.0
    %806 = vmatprep.subr.mxu0 0.0
    %807 = vmatpush2.msra.mxu0 0.0
    %808 = vmatprep.subr.mxu0 0.0
    %809 = vmatpush2.msra.mxu0 0.0
    %810 = vmatprep.subr.mxu0 0.0
    %811 = vmatpush2.msra.mxu0 0.0
    %812 = vmatprep.subr.mxu0 0.0
    %813 = vmatpush2.msra.mxu0 0.0
    %814 = vmatprep.subr.mxu0 0.0
    %815 = vmatpush2.msra.mxu0 0.0
    %816 = vmatprep.subr.mxu0 0.0
    %817 = vmatpush2.msra.mxu0 0.0
    %818 = vmatprep.subr.mxu0 0.0
    %819 = vmatpush2.msra.mxu0 0.0
    %820 = vmatprep.subr.mxu0 0.0
    %821 = vmatpush2.msra.mxu0 0.0
    %822 = vmatprep.subr.mxu0 0.0
    %823 = vmatpush2.msra.mxu0 0.0
    %824 = vmatprep.subr.mxu0 0.0
    %825 = vmatpush2.msra.mxu0 0.0
    %826 = vmatprep.subr.mxu0 0.0
    %827 = vmatpush2.msra.mxu0 0.0
    %828 = vmatprep.subr.mxu0 0.0
    %829 = vmatpush2.msra.mxu0 0.0
    %830 = vmatprep.subr.mxu0 0.0
    %831 = vmatpush2.msra.mxu0 0.0
    %832 = vmatprep.subr.mxu0 0.0
    %833 = vmatpush2.msra.mxu0 0.0
    %834 = vmatprep.mubr.f32.mxu0 0.0
    %835 = vmatmul.mubr.f32.gmra.mxu0 %v768
    %v836 = vpop.f32.mrf.mxu0
    %v837 = vadd.f32 0.0, %v836
    %v838 = vpop.f32.mrf.mxu0
    %839 = vdwg.mxu0
    %v840 = vadd.f32 %v297, %v837
    %v841 = vmul.f32 %v840, 0.5
    %v842 = vtanh.pop %v841
    %v843 = vmul.f32 %v842, 0.5
    %v844 = vadd.f32 %v843, 0.5
    %v845 = vadd.f32 %v837, %v292
    %847 = vrot.lane.b32.xlu0 %v845, 64
    %v848 = vpop.permute.xlu0 %847
    %v850 = vmul.f32 %v844, %v848
    %852 = vrot.lane.b32.xlu0 %v850, 64
    %v853 = vpop.permute.xlu0 %852
    %v855 = vadd.f32 %v283, %v853
    %v856 = vtanh.pop %v855
    %v857 = vsub.f32 1.0, %v844
    %859 = vrot.lane.b32.xlu0 %v856, 96
    %v860 = vpop.permute.xlu0 %859
    %v862 = vmul.f32 %v857, %v860
    %v863 = vmul.f32 %v844, %v764
    %v864 = vadd.f32 %v862, %v863
    %866 = vrot.lane.b32.xlu0 %v864, 96
    %v867 = vpop.permute.xlu0 %866
    %v868 = vsel %vm466, %v867, 0
    %870 = vmatprep.subr.mxu0 0.0
    %871 = vmatpush1.msra.mxu0 0.0
    %872 = vmatprep.subr.mxu0 0.0
    %873 = vmatpush1.msra.mxu0 0.0
    %874 = vmatprep.subr.mxu0 0.0
    %875 = vmatpush1.msra.mxu0 0.0
    %876 = vmatprep.subr.mxu0 0.0
    %877 = vmatpush1.msra.mxu0 0.0
    %878 = vmatprep.subr.mxu0 0.0
    %879 = vmatpush1.msra.mxu0 0.0
    %880 = vmatprep.subr.mxu0 0.0
    %881 = vmatpush1.msra.mxu0 0.0
    %882 = vmatprep.subr.mxu0 0.0
    %883 = vmatpush1.msra.mxu0 0.0
    %884 = vmatprep.subr.mxu0 0.0
    %885 = vmatpush1.msra.mxu0 0.0
    %886 = vmatprep.subr.mxu0 0.0
    %887 = vmatpush1.msra.mxu0 0.0
    %888 = vmatprep.subr.mxu0 0.0
    %889 = vmatpush1.msra.mxu0 0.0
    %890 = vmatprep.subr.mxu0 0.0
    %891 = vmatpush1.msra.mxu0 0.0
    %892 = vmatprep.subr.mxu0 0.0
    %893 = vmatpush1.msra.mxu0 0.0
    %894 = vmatprep.subr.mxu0 0.0
    %895 = vmatpush1.msra.mxu0 %v51
    %896 = vmatprep.subr.mxu0 0.0
    %897 = vmatpush1.msra.mxu0 %v50
    %898 = vmatprep.subr.mxu0 0.0
    %899 = vmatpush1.msra.mxu0 %v49
    %900 = vmatprep.subr.mxu0 0.0
    %901 = vmatpush1.msra.mxu0 %v48
    %902 = vmatprep.subr.mxu0 0.0
    %903 = vmatpush2.msra.mxu0 0.0
    %904 = vmatprep.subr.mxu0 0.0
    %905 = vmatpush2.msra.mxu0 0.0
    %906 = vmatprep.subr.mxu0 0.0
    %907 = vmatpush2.msra.mxu0 0.0
    %908 = vmatprep.subr.mxu0 0.0
    %909 = vmatpush2.msra.mxu0 0.0
    %910 = vmatprep.subr.mxu0 0.0
    %911 = vmatpush2.msra.mxu0 0.0
    %912 = vmatprep.subr.mxu0 0.0
    %913 = vmatpush2.msra.mxu0 0.0
    %914 = vmatprep.subr.mxu0 0.0
    %915 = vmatpush2.msra.mxu0 0.0
    %916 = vmatprep.subr.mxu0 0.0
    %917 = vmatpush2.msra.mxu0 0.0
    %918 = vmatprep.subr.mxu0 0.0
    %919 = vmatpush2.msra.mxu0 0.0
    %920 = vmatprep.subr.mxu0 0.0
    %921 = vmatpush2.msra.mxu0 0.0
    %922 = vmatprep.subr.mxu0 0.0
    %923 = vmatpush2.msra.mxu0 0.0
    %924 = vmatprep.subr.mxu0 0.0
    %925 = vmatpush2.msra.mxu0 0.0
    %926 = vmatprep.subr.mxu0 0.0
    %927 = vmatpush2.msra.mxu0 0.0
    %928 = vmatprep.subr.mxu0 0.0
    %929 = vmatpush2.msra.mxu0 0.0
    %930 = vmatprep.subr.mxu0 0.0
    %931 = vmatpush2.msra.mxu0 0.0
    %932 = vmatprep.subr.mxu0 0.0
    %933 = vmatpush2.msra.mxu0 0.0
    %934 = vmatprep.mubr.f32.mxu0 0.0
    %935 = vmatmul.mubr.f32.gmra.mxu0 %v868
    %v936 = vpop.f32.mrf.mxu0
    %v937 = vadd.f32 0.0, %v936
    %v938 = vpop.f32.mrf.mxu0
    %939 = vdwg.mxu0
    %v940 = vadd.f32 %v298, %v937
    %v941 = vmul.f32 %v940, 0.5
    %v942 = vtanh.pop %v941
    %v943 = vmul.f32 %v942, 0.5
    %v944 = vadd.f32 %v943, 0.5
    %v945 = vadd.f32 %v937, %v292
    %947 = vrot.lane.b32.xlu0 %v945, 64
    %v948 = vpop.permute.xlu0 %947
    %v950 = vmul.f32 %v944, %v948
    %952 = vrot.lane.b32.xlu0 %v950, 64
    %v953 = vpop.permute.xlu0 %952
    %v955 = vadd.f32 %v284, %v953
    %v956 = vtanh.pop %v955
    %v957 = vsub.f32 1.0, %v944
    %959 = vrot.lane.b32.xlu0 %v956, 96
    %v960 = vpop.permute.xlu0 %959
    %v962 = vmul.f32 %v957, %v960
    %v963 = vmul.f32 %v944, %v864
    %v964 = vadd.f32 %v962, %v963
    %966 = vrot.lane.b32.xlu0 %v964, 96
    %v967 = vpop.permute.xlu0 %966
    %v968 = vsel %vm466, %v967, 0
    %970 = vmatprep.subr.mxu0 0.0
    %971 = vmatpush1.msra.mxu0 0.0
    %972 = vmatprep.subr.mxu0 0.0
    %973 = vmatpush1.msra.mxu0 0.0
    %974 = vmatprep.subr.mxu0 0.0
    %975 = vmatpush1.msra.mxu0 0.0
    %976 = vmatprep.subr.mxu0 0.0
    %977 = vmatpush1.msra.mxu0 0.0
    %978 = vmatprep.subr.mxu0 0.0
    %979 = vmatpush1.msra.mxu0 0.0
    %980 = vmatprep.subr.mxu0 0.0
    %981 = vmatpush1.msra.mxu0 0.0
    %982 = vmatprep.subr.mxu0 0.0
    %983 = vmatpush1.msra.mxu0 0.0
    %984 = vmatprep.subr.mxu0 0.0
    %985 = vmatpush1.msra.mxu0 0.0
    %986 = vmatprep.subr.mxu0 0.0
    %987 = vmatpush1.msra.mxu0 0.0
    %988 = vmatprep.subr.mxu0 0.0
    %989 = vmatpush1.msra.mxu0 0.0
    %990 = vmatprep.subr.mxu0 0.0
    %991 = vmatpush1.msra.mxu0 0.0
    %992 = vmatprep.subr.mxu0 0.0
    %993 = vmatpush1.msra.mxu0 0.0
    %994 = vmatprep.subr.mxu0 0.0
    %995 = vmatpush1.msra.mxu0 %v51
    %996 = vmatprep.subr.mxu0 0.0
    %997 = vmatpush1.msra.mxu0 %v50
    %998 = vmatprep.subr.mxu0 0.0
    %999 = vmatpush1.msra.mxu0 %v49
    %1000 = vmatprep.subr.mxu0 0.0
    %1001 = vmatpush1.msra.mxu0 %v48
    %1002 = vmatprep.subr.mxu0 0.0
    %1003 = vmatpush2.msra.mxu0 0.0
    %1004 = vmatprep.subr.mxu0 0.0
    %1005 = vmatpush2.msra.mxu0 0.0
    %1006 = vmatprep.subr.mxu0 0.0
    %1007 = vmatpush2.msra.mxu0 0.0
    %1008 = vmatprep.subr.mxu0 0.0
    %1009 = vmatpush2.msra.mxu0 0.0
    %1010 = vmatprep.subr.mxu0 0.0
    %1011 = vmatpush2.msra.mxu0 0.0
    %1012 = vmatprep.subr.mxu0 0.0
    %1013 = vmatpush2.msra.mxu0 0.0
    %1014 = vmatprep.subr.mxu0 0.0
    %1015 = vmatpush2.msra.mxu0 0.0
    %1016 = vmatprep.subr.mxu0 0.0
    %1017 = vmatpush2.msra.mxu0 0.0
    %1018 = vmatprep.subr.mxu0 0.0
    %1019 = vmatpush2.msra.mxu0 0.0
    %1020 = vmatprep.subr.mxu0 0.0
    %1021 = vmatpush2.msra.mxu0 0.0
    %1022 = vmatprep.subr.mxu0 0.0
    %1023 = vmatpush2.msra.mxu0 0.0
    %1024 = vmatprep.subr.mxu0 0.0
    %1025 = vmatpush2.msra.mxu0 0.0
    %1026 = vmatprep.subr.mxu0 0.0
    %1027 = vmatpush2.msra.mxu0 0.0
    %1028 = vmatprep.subr.mxu0 0.0
    %1029 = vmatpush2.msra.mxu0 0.0
    %1030 = vmatprep.subr.mxu0 0.0
    %1031 = vmatpush2.msra.mxu0 0.0
    %1032 = vmatprep.subr.mxu0 0.0
    %1033 = vmatpush2.msra.mxu0 0.0
    %1034 = vmatprep.mubr.f32.mxu0 0.0
    %1035 = vmatmul.mubr.f32.gmra.mxu0 %v968
    %v1036 = vpop.f32.mrf.mxu0
    %v1037 = vadd.f32 0.0, %v1036
    %v1038 = vpop.f32.mrf.mxu0
    %1039 = vdwg.mxu0
    %v1040 = vadd.f32 %v299, %v1037
    %v1041 = vmul.f32 %v1040, 0.5
    %v1042 = vtanh.pop %v1041
    %v1043 = vmul.f32 %v1042, 0.5
    %v1044 = vadd.f32 %v1043, 0.5
    %v1045 = vadd.f32 %v1037, %v292
    %1047 = vrot.lane.b32.xlu0 %v1045, 64
    %v1048 = vpop.permute.xlu0 %1047
    %v1050 = vmul.f32 %v1044, %v1048
    %1052 = vrot.lane.b32.xlu0 %v1050, 64
    %v1053 = vpop.permute.xlu0 %1052
    %v1055 = vadd.f32 %v285, %v1053
    %v1056 = vtanh.pop %v1055
    %v1057 = vsub.f32 1.0, %v1044
    %1059 = vrot.lane.b32.xlu0 %v1056, 96
    %v1060 = vpop.permute.xlu0 %1059
    %v1062 = vmul.f32 %v1057, %v1060
    %v1063 = vmul.f32 %v1044, %v964
    %v1064 = vadd.f32 %v1062, %v1063
    %1066 = vrot.lane.b32.xlu0 %v1064, 96
    %v1067 = vpop.permute.xlu0 %1066
    %v1068 = vsel %vm466, %v1067, 0
    %1070 = vmatprep.subr.mxu0 0.0
    %1071 = vmatpush1.msra.mxu0 0.0
    %1072 = vmatprep.subr.mxu0 0.0
    %1073 = vmatpush1.msra.mxu0 0.0
    %1074 = vmatprep.subr.mxu0 0.0
    %1075 = vmatpush1.msra.mxu0 0.0
    %1076 = vmatprep.subr.mxu0 0.0
    %1077 = vmatpush1.msra.mxu0 0.0
    %1078 = vmatprep.subr.mxu0 0.0
    %1079 = vmatpush1.msra.mxu0 0.0
    %1080 = vmatprep.subr.mxu0 0.0
    %1081 = vmatpush1.msra.mxu0 0.0
    %1082 = vmatprep.subr.mxu0 0.0
    %1083 = vmatpush1.msra.mxu0 0.0
    %1084 = vmatprep.subr.mxu0 0.0
    %1085 = vmatpush1.msra.mxu0 0.0
    %1086 = vmatprep.subr.mxu0 0.0
    %1087 = vmatpush1.msra.mxu0 0.0
    %1088 = vmatprep.subr.mxu0 0.0
    %1089 = vmatpush1.msra.mxu0 0.0
    %1090 = vmatprep.subr.mxu0 0.0
    %1091 = vmatpush1.msra.mxu0 0.0
    %1092 = vmatprep.subr.mxu0 0.0
    %1093 = vmatpush1.msra.mxu0 0.0
    %1094 = vmatprep.subr.mxu0 0.0
    %1095 = vmatpush1.msra.mxu0 %v51
    %1096 = vmatprep.subr.mxu0 0.0
    %1097 = vmatpush1.msra.mxu0 %v50
    %1098 = vmatprep.subr.mxu0 0.0
    %1099 = vmatpush1.msra.mxu0 %v49
    %1100 = vmatprep.subr.mxu0 0.0
    %1101 = vmatpush1.msra.mxu0 %v48
    %1102 = vmatprep.subr.mxu0 0.0
    %1103 = vmatpush2.msra.mxu0 0.0
    %1104 = vmatprep.subr.mxu0 0.0
    %1105 = vmatpush2.msra.mxu0 0.0
    %1106 = vmatprep.subr.mxu0 0.0
    %1107 = vmatpush2.msra.mxu0 0.0
    %1108 = vmatprep.subr.mxu0 0.0
    %1109 = vmatpush2.msra.mxu0 0.0
    %1110 = vmatprep.subr.mxu0 0.0
    %1111 = vmatpush2.msra.mxu0 0.0
    %1112 = vmatprep.subr.mxu0 0.0
    %1113 = vmatpush2.msra.mxu0 0.0
    %1114 = vmatprep.subr.mxu0 0.0
    %1115 = vmatpush2.msra.mxu0 0.0
    %1116 = vmatprep.subr.mxu0 0.0
    %1117 = vmatpush2.msra.mxu0 0.0
    %1118 = vmatprep.subr.mxu0 0.0
    %1119 = vmatpush2.msra.mxu0 0.0
    %1120 = vmatprep.subr.mxu0 0.0
    %1121 = vmatpush2.msra.mxu0 0.0
    %1122 = vmatprep.subr.mxu0 0.0
    %1123 = vmatpush2.msra.mxu0 0.0
    %1124 = vmatprep.subr.mxu0 0.0
    %1125 = vmatpush2.msra.mxu0 0.0
    %1126 = vmatprep.subr.mxu0 0.0
    %1127 = vmatpush2.msra.mxu0 0.0
    %1128 = vmatprep.subr.mxu0 0.0
    %1129 = vmatpush2.msra.mxu0 0.0
    %1130 = vmatprep.subr.mxu0 0.0
    %1131 = vmatpush2.msra.mxu0 0.0
    %1132 = vmatprep.subr.mxu0 0.0
    %1133 = vmatpush2.msra.mxu0 0.0
    %1134 = vmatprep.mubr.f32.mxu0 0.0
    %1135 = vmatmul.mubr.f32.gmra.mxu0 %v1068
    %v1136 = vpop.f32.mrf.mxu0
    %v1137 = vadd.f32 0.0, %v1136
    %v1138 = vpop.f32.mrf.mxu0
    %1139 = vdwg.mxu0
    %v1140 = vadd.f32 %v300, %v1137
    %v1141 = vmul.f32 %v1140, 0.5
    %v1142 = vtanh.pop %v1141
    %v1143 = vmul.f32 %v1142, 0.5
    %v1144 = vadd.f32 %v1143, 0.5
    %v1145 = vadd.f32 %v1137, %v292
    %1147 = vrot.lane.b32.xlu0 %v1145, 64
    %v1148 = vpop.permute.xlu0 %1147
    %v1150 = vmul.f32 %v1144, %v1148
    %1152 = vrot.lane.b32.xlu0 %v1150, 64
    %v1153 = vpop.permute.xlu0 %1152
    %v1155 = vadd.f32 %v286, %v1153
    %v1156 = vtanh.pop %v1155
    %v1157 = vsub.f32 1.0, %v1144
    %1159 = vrot.lane.b32.xlu0 %v1156, 96
    %v1160 = vpop.permute.xlu0 %1159
    %v1162 = vmul.f32 %v1157, %v1160
    %v1163 = vmul.f32 %v1144, %v1064
    %v1164 = vadd.f32 %v1162, %v1163
    %1166 = vrot.lane.b32.xlu0 %v1164, 96
    %v1167 = vpop.permute.xlu0 %1166
    %v1168 = vsel %vm466, %v1167, 0
    %1170 = vmatprep.subr.mxu0 0.0
    %1171 = vmatpush1.msra.mxu0 0.0
    %1172 = vmatprep.subr.mxu0 0.0
    %1173 = vmatpush1.msra.mxu0 0.0
    %1174 = vmatprep.subr.mxu0 0.0
    %1175 = vmatpush1.msra.mxu0 0.0
    %1176 = vmatprep.subr.mxu0 0.0
    %1177 = vmatpush1.msra.mxu0 0.0
    %1178 = vmatprep.subr.mxu0 0.0
    %1179 = vmatpush1.msra.mxu0 0.0
    %1180 = vmatprep.subr.mxu0 0.0
    %1181 = vmatpush1.msra.mxu0 0.0
    %1182 = vmatprep.subr.mxu0 0.0
    %1183 = vmatpush1.msra.mxu0 0.0
    %1184 = vmatprep.subr.mxu0 0.0
    %1185 = vmatpush1.msra.mxu0 0.0
    %1186 = vmatprep.subr.mxu0 0.0
    %1187 = vmatpush1.msra.mxu0 0.0
    %1188 = vmatprep.subr.mxu0 0.0
    %1189 = vmatpush1.msra.mxu0 0.0
    %1190 = vmatprep.subr.mxu0 0.0
    %1191 = vmatpush1.msra.mxu0 0.0
    %1192 = vmatprep.subr.mxu0 0.0
    %1193 = vmatpush1.msra.mxu0 0.0
    %1194 = vmatprep.subr.mxu0 0.0
    %1195 = vmatpush1.msra.mxu0 %v51
    %1196 = vmatprep.subr.mxu0 0.0
    %1197 = vmatpush1.msra.mxu0 %v50
    %1198 = vmatprep.subr.mxu0 0.0
    %1199 = vmatpush1.msra.mxu0 %v49
    %1200 = vmatprep.subr.mxu0 0.0
    %1201 = vmatpush1.msra.mxu0 %v48
    %1202 = vmatprep.subr.mxu0 0.0
    %1203 = vmatpush2.msra.mxu0 0.0
    %1204 = vmatprep.subr.mxu0 0.0
    %1205 = vmatpush2.msra.mxu0 0.0
    %1206 = vmatprep.subr.mxu0 0.0
    %1207 = vmatpush2.msra.mxu0 0.0
    %1208 = vmatprep.subr.mxu0 0.0
    %1209 = vmatpush2.msra.mxu0 0.0
    %1210 = vmatprep.subr.mxu0 0.0
    %1211 = vmatpush2.msra.mxu0 0.0
    %1212 = vmatprep.subr.mxu0 0.0
    %1213 = vmatpush2.msra.mxu0 0.0
    %1214 = vmatprep.subr.mxu0 0.0
    %1215 = vmatpush2.msra.mxu0 0.0
    %1216 = vmatprep.subr.mxu0 0.0
    %1217 = vmatpush2.msra.mxu0 0.0
    %1218 = vmatprep.subr.mxu0 0.0
    %1219 = vmatpush2.msra.mxu0 0.0
    %1220 = vmatprep.subr.mxu0 0.0
    %1221 = vmatpush2.msra.mxu0 0.0
    %1222 = vmatprep.subr.mxu0 0.0
    %1223 = vmatpush2.msra.mxu0 0.0
    %1224 = vmatprep.subr.mxu0 0.0
    %1225 = vmatpush2.msra.mxu0 0.0
    %1226 = vmatprep.subr.mxu0 0.0
    %1227 = vmatpush2.msra.mxu0 0.0
    %1228 = vmatprep.subr.mxu0 0.0
    %1229 = vmatpush2.msra.mxu0 0.0
    %1230 = vmatprep.subr.mxu0 0.0
    %1231 = vmatpush2.msra.mxu0 0.0
    %1232 = vmatprep.subr.mxu0 0.0
    %1233 = vmatpush2.msra.mxu0 0.0
    %1234 = vmatprep.mubr.f32.mxu0 0.0
    %1235 = vmatmul.mubr.f32.gmra.mxu0 %v1168
    %v1236 = vpop.f32.mrf.mxu0
    %v1237 = vadd.f32 0.0, %v1236
    %v1238 = vpop.f32.mrf.mxu0
    %1239 = vdwg.mxu0
    %v1240 = vadd.f32 %v301, %v1237
    %v1241 = vmul.f32 %v1240, 0.5
    %v1242 = vtanh.pop %v1241
    %v1243 = vmul.f32 %v1242, 0.5
    %v1244 = vadd.f32 %v1243, 0.5
    %v1245 = vadd.f32 %v1237, %v292
    %1247 = vrot.lane.b32.xlu0 %v1245, 64
    %v1248 = vpop.permute.xlu0 %1247
    %v1250 = vmul.f32 %v1244, %v1248
    %1252 = vrot.lane.b32.xlu0 %v1250, 64
    %v1253 = vpop.permute.xlu0 %1252
    %v1255 = vadd.f32 %v287, %v1253
    %v1256 = vtanh.pop %v1255
    %v1257 = vsub.f32 1.0, %v1244
    %1259 = vrot.lane.b32.xlu0 %v1256, 96
    %v1260 = vpop.permute.xlu0 %1259
    %v1262 = vmul.f32 %v1257, %v1260
    %v1263 = vmul.f32 %v1244, %v1164
    %v1264 = vadd.f32 %v1262, %v1263
    %1266 = vrot.lane.b32.xlu0 %v1264, 96
    %v1267 = vpop.permute.xlu0 %1266
    %v1268 = vsel %vm466, %v1267, 0
    %1270 = vmatprep.subr.mxu0 0.0
    %1271 = vmatpush1.msra.mxu0 0.0
    %1272 = vmatprep.subr.mxu0 0.0
    %1273 = vmatpush1.msra.mxu0 0.0
    %1274 = vmatprep.subr.mxu0 0.0
    %1275 = vmatpush1.msra.mxu0 0.0
    %1276 = vmatprep.subr.mxu0 0.0
    %1277 = vmatpush1.msra.mxu0 0.0
    %1278 = vmatprep.subr.mxu0 0.0
    %1279 = vmatpush1.msra.mxu0 0.0
    %1280 = vmatprep.subr.mxu0 0.0
    %1281 = vmatpush1.msra.mxu0 0.0
    %1282 = vmatprep.subr.mxu0 0.0
    %1283 = vmatpush1.msra.mxu0 0.0
    %1284 = vmatprep.subr.mxu0 0.0
    %1285 = vmatpush1.msra.mxu0 0.0
    %1286 = vmatprep.subr.mxu0 0.0
    %1287 = vmatpush1.msra.mxu0 0.0
    %1288 = vmatprep.subr.mxu0 0.0
    %1289 = vmatpush1.msra.mxu0 0.0
    %1290 = vmatprep.subr.mxu0 0.0
    %1291 = vmatpush1.msra.mxu0 0.0
    %1292 = vmatprep.subr.mxu0 0.0
    %1293 = vmatpush1.msra.mxu0 0.0
    %1294 = vmatprep.subr.mxu0 0.0
    %1295 = vmatpush1.msra.mxu0 %v55
    %1296 = vmatprep.subr.mxu0 0.0
    %1297 = vmatpush1.msra.mxu0 %v54
    %1298 = vmatprep.subr.mxu0 0.0
    %1299 = vmatpush1.msra.mxu0 %v53
    %1300 = vmatprep.subr.mxu0 0.0
    %1301 = vmatpush1.msra.mxu0 %v52
    %1302 = vmatprep.subr.mxu0 0.0
    %1303 = vmatpush2.msra.mxu0 0.0
    %1304 = vmatprep.subr.mxu0 0.0
    %1305 = vmatpush2.msra.mxu0 0.0
    %1306 = vmatprep.subr.mxu0 0.0
    %1307 = vmatpush2.msra.mxu0 0.0
    %1308 = vmatprep.subr.mxu0 0.0
    %1309 = vmatpush2.msra.mxu0 0.0
    %1310 = vmatprep.subr.mxu0 0.0
    %1311 = vmatpush2.msra.mxu0 0.0
    %1312 = vmatprep.subr.mxu0 0.0
    %1313 = vmatpush2.msra.mxu0 0.0
    %1314 = vmatprep.subr.mxu0 0.0
    %1315 = vmatpush2.msra.mxu0 0.0
    %1316 = vmatprep.subr.mxu0 0.0
    %1317 = vmatpush2.msra.mxu0 0.0
    %1318 = vmatprep.subr.mxu0 0.0
    %1319 = vmatpush2.msra.mxu0 0.0
    %1320 = vmatprep.subr.mxu0 0.0
    %1321 = vmatpush2.msra.mxu0 0.0
    %1322 = vmatprep.subr.mxu0 0.0
    %1323 = vmatpush2.msra.mxu0 0.0
    %1324 = vmatprep.subr.mxu0 0.0
    %1325 = vmatpush2.msra.mxu0 0.0
    %1326 = vmatprep.subr.mxu0 0.0
    %1327 = vmatpush2.msra.mxu0 0.0
    %1328 = vmatprep.subr.mxu0 0.0
    %1329 = vmatpush2.msra.mxu0 0.0
    %1330 = vmatprep.subr.mxu0 0.0
    %1331 = vmatpush2.msra.mxu0 0.0
    %1332 = vmatprep.subr.mxu0 0.0
    %1333 = vmatpush2.msra.mxu0 0.0
    %1334 = vmatprep.mubr.f32.mxu0 0.0
    %1335 = vmatmul.mubr.f32.gmra.mxu0 %v1268
    %v1336 = vpop.f32.mrf.mxu0
    %v1337 = vadd.f32 0.0, %v1336
    %v1338 = vpop.f32.mrf.mxu0
    %1339 = vdwg.mxu0
    %v1340 = vadd.f32 %v458, %v1337
    %v1341 = vmul.f32 %v1340, 0.5
    %v1342 = vtanh.pop %v1341
    %v1343 = vmul.f32 %v1342, 0.5
    %v1344 = vadd.f32 %v1343, 0.5
    %v1345 = vadd.f32 %v1337, %v456
    %1347 = vrot.lane.b32.xlu0 %v1345, 64
    %v1348 = vpop.permute.xlu0 %1347
    %v1350 = vmul.f32 %v1344, %v1348
    %1352 = vrot.lane.b32.xlu0 %v1350, 64
    %v1353 = vpop.permute.xlu0 %1352
    %v1355 = vadd.f32 %v414, %v1353
    %v1356 = vtanh.pop %v1355
    %v1357 = vsub.f32 1.0, %v1344
    %1359 = vrot.lane.b32.xlu0 %v1356, 96
    %v1360 = vpop.permute.xlu0 %1359
    %v1362 = vmul.f32 %v1357, %v1360
    %v1363 = vmul.f32 %v1344, %v1264
    %v1364 = vadd.f32 %v1362, %v1363
    %1366 = vrot.lane.b32.xlu0 %v1364, 96
    %v1367 = vpop.permute.xlu0 %1366
    %1369 = vst.msk [vmem:[#allocation2] sm:$0xff] %vm466, %v1367
    %v1370 = vsel %vm466, %v1367, 0
    %1372 = vmatprep.subr.mxu0 0.0
    %1373 = vmatpush1.msra.mxu0 0.0
    %1374 = vmatprep.subr.mxu0 0.0
    %1375 = vmatpush1.msra.mxu0 0.0
    %1376 = vmatprep.subr.mxu0 0.0
    %1377 = vmatpush1.msra.mxu0 0.0
    %1378 = vmatprep.subr.mxu0 0.0
    %1379 = vmatpush1.msra.mxu0 0.0
    %1380 = vmatprep.subr.mxu0 0.0
    %1381 = vmatpush1.msra.mxu0 0.0
    %1382 = vmatprep.subr.mxu0 0.0
    %1383 = vmatpush1.msra.mxu0 0.0
    %1384 = vmatprep.subr.mxu0 0.0
    %1385 = vmatpush1.msra.mxu0 0.0
    %1386 = vmatprep.subr.mxu0 0.0
    %1387 = vmatpush1.msra.mxu0 0.0
    %1388 = vmatprep.subr.mxu0 0.0
    %1389 = vmatpush1.msra.mxu0 0.0
    %1390 = vmatprep.subr.mxu0 0.0
    %1391 = vmatpush1.msra.mxu0 0.0
    %1392 = vmatprep.subr.mxu0 0.0
    %1393 = vmatpush1.msra.mxu0 0.0
    %1394 = vmatprep.subr.mxu0 0.0
    %1395 = vmatpush1.msra.mxu0 0.0
    %1396 = vmatprep.subr.mxu0 0.0
    %1397 = vmatpush1.msra.mxu0 %v55
    %1398 = vmatprep.subr.mxu0 0.0
    %1399 = vmatpush1.msra.mxu0 %v54
    %1400 = vmatprep.subr.mxu0 0.0
    %1401 = vmatpush1.msra.mxu0 %v53
    %1402 = vmatprep.subr.mxu0 0.0
    %1403 = vmatpush1.msra.mxu0 %v52
    %1404 = vmatprep.subr.mxu0 0.0
    %1405 = vmatpush2.msra.mxu0 0.0
    %1406 = vmatprep.subr.mxu0 0.0
    %1407 = vmatpush2.msra.mxu0 0.0
    %1408 = vmatprep.subr.mxu0 0.0
    %1409 = vmatpush2.msra.mxu0 0.0
    %1410 = vmatprep.subr.mxu0 0.0
    %1411 = vmatpush2.msra.mxu0 0.0
    %1412 = vmatprep.subr.mxu0 0.0
    %1413 = vmatpush2.msra.mxu0 0.0
    %1414 = vmatprep.subr.mxu0 0.0
    %1415 = vmatpush2.msra.mxu0 0.0
    %1416 = vmatprep.subr.mxu0 0.0
    %1417 = vmatpush2.msra.mxu0 0.0
    %1418 = vmatprep.subr.mxu0 0.0
    %1419 = vmatpush2.msra.mxu0 0.0
    %1420 = vmatprep.subr.mxu0 0.0
    %1421 = vmatpush2.msra.mxu0 0.0
    %1422 = vmatprep.subr.mxu0 0.0
    %1423 = vmatpush2.msra.mxu0 0.0
    %1424 = vmatprep.subr.mxu0 0.0
    %1425 = vmatpush2.msra.mxu0 0.0
    %1426 = vmatprep.subr.mxu0 0.0
    %1427 = vmatpush2.msra.mxu0 0.0
    %1428 = vmatprep.subr.mxu0 0.0
    %1429 = vmatpush2.msra.mxu0 0.0
    %1430 = vmatprep.subr.mxu0 0.0
    %1431 = vmatpush2.msra.mxu0 0.0
    %1432 = vmatprep.subr.mxu0 0.0
    %1433 = vmatpush2.msra.mxu0 0.0
    %1434 = vmatprep.subr.mxu0 0.0
    %1435 = vmatpush2.msra.mxu0 0.0
    %1436 = vmatprep.mubr.f32.mxu0 0.0
    %1437 = vmatmul.mubr.f32.gmra.mxu0 %v1370
    %v1438 = vpop.f32.mrf.mxu0
    %v1439 = vadd.f32 0.0, %v1438
    %v1440 = vpop.f32.mrf.mxu0
    %1441 = vdwg.mxu0
    %v1442 = vadd.f32 %v459, %v1439
    %v1443 = vmul.f32 %v1442, 0.5
    %v1444 = vtanh.pop %v1443
    %v1445 = vmul.f32 %v1444, 0.5
    %v1446 = vadd.f32 %v1445, 0.5
    %v1447 = vadd.f32 %v1439, %v456
    %1449 = vrot.lane.b32.xlu0 %v1447, 64
    %v1450 = vpop.permute.xlu0 %1449
    %v1452 = vmul.f32 %v1446, %v1450
    %1454 = vrot.lane.b32.xlu0 %v1452, 64
    %v1455 = vpop.permute.xlu0 %1454
    %v1457 = vadd.f32 %v419, %v1455
    %v1458 = vtanh.pop %v1457
    %v1459 = vsub.f32 1.0, %v1446
    %1461 = vrot.lane.b32.xlu0 %v1458, 96
    %v1462 = vpop.permute.xlu0 %1461
    %v1464 = vmul.f32 %v1459, %v1462
    %v1465 = vmul.f32 %v1446, %v1364
    %v1466 = vadd.f32 %v1464, %v1465
    %1468 = vrot.lane.b32.xlu0 %v1466, 96
    %v1469 = vpop.permute.xlu0 %1468
    %1471 = vst.msk [vmem:[#allocation2 + $0x8] sm:$0xff] %vm466, %v1469
    %v1472 = vsel %vm466, %v1469, 0
    %1474 = vmatprep.subr.mxu0 0.0
    %1475 = vmatpush1.msra.mxu0 0.0
    %1476 = vmatprep.subr.mxu0 0.0
    %1477 = vmatpush1.msra.mxu0 0.0
    %1478 = vmatprep.subr.mxu0 0.0
    %1479 = vmatpush1.msra.mxu0 0.0
    %1480 = vmatprep.subr.mxu0 0.0
    %1481 = vmatpush1.msra.mxu0 0.0
    %1482 = vmatprep.subr.mxu0 0.0
    %1483 = vmatpush1.msra.mxu0 0.0
    %1484 = vmatprep.subr.mxu0 0.0
    %1485 = vmatpush1.msra.mxu0 0.0
    %1486 = vmatprep.subr.mxu0 0.0
    %1487 = vmatpush1.msra.mxu0 0.0
    %1488 = vmatprep.subr.mxu0 0.0
    %1489 = vmatpush1.msra.mxu0 0.0
    %1490 = vmatprep.subr.mxu0 0.0
    %1491 = vmatpush1.msra.mxu0 0.0
    %1492 = vmatprep.subr.mxu0 0.0
    %1493 = vmatpush1.msra.mxu0 0.0
    %1494 = vmatprep.subr.mxu0 0.0
    %1495 = vmatpush1.msra.mxu0 0.0
    %1496 = vmatprep.subr.mxu0 0.0
    %1497 = vmatpush1.msra.mxu0 0.0
    %1498 = vmatprep.subr.mxu0 0.0
    %1499 = vmatpush1.msra.mxu0 %v55
    %1500 = vmatprep.subr.mxu0 0.0
    %1501 = vmatpush1.msra.mxu0 %v54
    %1502 = vmatprep.subr.mxu0 0.0
    %1503 = vmatpush1.msra.mxu0 %v53
    %1504 = vmatprep.subr.mxu0 0.0
    %1505 = vmatpush1.msra.mxu0 %v52
    %1506 = vmatprep.subr.mxu0 0.0
    %1507 = vmatpush2.msra.mxu0 0.0
    %1508 = vmatprep.subr.mxu0 0.0
    %1509 = vmatpush2.msra.mxu0 0.0
    %1510 = vmatprep.subr.mxu0 0.0
    %1511 = vmatpush2.msra.mxu0 0.0
    %1512 = vmatprep.subr.mxu0 0.0
    %1513 = vmatpush2.msra.mxu0 0.0
    %1514 = vmatprep.subr.mxu0 0.0
    %1515 = vmatpush2.msra.mxu0 0.0
    %1516 = vmatprep.subr.mxu0 0.0
    %1517 = vmatpush2.msra.mxu0 0.0
    %1518 = vmatprep.subr.mxu0 0.0
    %1519 = vmatpush2.msra.mxu0 0.0
    %1520 = vmatprep.subr.mxu0 0.0
    %1521 = vmatpush2.msra.mxu0 0.0
    %1522 = vmatprep.subr.mxu0 0.0
    %1523 = vmatpush2.msra.mxu0 0.0
    %1524 = vmatprep.subr.mxu0 0.0
    %1525 = vmatpush2.msra.mxu0 0.0
    %1526 = vmatprep.subr.mxu0 0.0
    %1527 = vmatpush2.msra.mxu0 0.0
    %1528 = vmatprep.subr.mxu0 0.0
    %1529 = vmatpush2.msra.mxu0 0.0
    %1530 = vmatprep.subr.mxu0 0.0
    %1531 = vmatpush2.msra.mxu0 0.0
    %1532 = vmatprep.subr.mxu0 0.0
    %1533 = vmatpush2.msra.mxu0 0.0
    %1534 = vmatprep.subr.mxu0 0.0
    %1535 = vmatpush2.msra.mxu0 0.0
    %1536 = vmatprep.subr.mxu0 0.0
    %1537 = vmatpush2.msra.mxu0 0.0
    %1538 = vmatprep.mubr.f32.mxu0 0.0
    %1539 = vmatmul.mubr.f32.gmra.mxu0 %v1472
    %v1540 = vpop.f32.mrf.mxu0
    %v1541 = vadd.f32 0.0, %v1540
    %v1542 = vpop.f32.mrf.mxu0
    %1543 = vdwg.mxu0
    %v1544 = vadd.f32 %v460, %v1541
    %v1545 = vmul.f32 %v1544, 0.5
    %v1546 = vtanh.pop %v1545
    %v1547 = vmul.f32 %v1546, 0.5
    %v1548 = vadd.f32 %v1547, 0.5
    %v1549 = vadd.f32 %v1541, %v456
    %1551 = vrot.lane.b32.xlu0 %v1549, 64
    %v1552 = vpop.permute.xlu0 %1551
    %v1554 = vmul.f32 %v1548, %v1552
    %1556 = vrot.lane.b32.xlu0 %v1554, 64
    %v1557 = vpop.permute.xlu0 %1556
    %v1559 = vadd.f32 %v424, %v1557
    %v1560 = vtanh.pop %v1559
    %v1561 = vsub.f32 1.0, %v1548
    %1563 = vrot.lane.b32.xlu0 %v1560, 96
    %v1564 = vpop.permute.xlu0 %1563
    %v1566 = vmul.f32 %v1561, %v1564
    %v1567 = vmul.f32 %v1548, %v1466
    %v1568 = vadd.f32 %v1566, %v1567
    %1570 = vrot.lane.b32.xlu0 %v1568, 96
    %v1571 = vpop.permute.xlu0 %1570
    %1573 = vst.msk [vmem:[#allocation2 + $0x10] sm:$0xff] %vm466, %v1571
    %v1574 = vsel %vm466, %v1571, 0
    %1576 = vmatprep.subr.mxu0 0.0
    %1577 = vmatpush1.msra.mxu0 0.0
    %1578 = vmatprep.subr.mxu0 0.0
    %1579 = vmatpush1.msra.mxu0 0.0
    %1580 = vmatprep.subr.mxu0 0.0
    %1581 = vmatpush1.msra.mxu0 0.0
    %1582 = vmatprep.subr.mxu0 0.0
    %1583 = vmatpush1.msra.mxu0 0.0
    %1584 = vmatprep.subr.mxu0 0.0
    %1585 = vmatpush1.msra.mxu0 0.0
    %1586 = vmatprep.subr.mxu0 0.0
    %1587 = vmatpush1.msra.mxu0 0.0
    %1588 = vmatprep.subr.mxu0 0.0
    %1589 = vmatpush1.msra.mxu0 0.0
    %1590 = vmatprep.subr.mxu0 0.0
    %1591 = vmatpush1.msra.mxu0 0.0
    %1592 = vmatprep.subr.mxu0 0.0
    %1593 = vmatpush1.msra.mxu0 0.0
    %1594 = vmatprep.subr.mxu0 0.0
    %1595 = vmatpush1.msra.mxu0 0.0
    %1596 = vmatprep.subr.mxu0 0.0
    %1597 = vmatpush1.msra.mxu0 0.0
    %1598 = vmatprep.subr.mxu0 0.0
    %1599 = vmatpush1.msra.mxu0 0.0
    %1600 = vmatprep.subr.mxu0 0.0
    %1601 = vmatpush1.msra.mxu0 %v55
    %1602 = vmatprep.subr.mxu0 0.0
    %1603 = vmatpush1.msra.mxu0 %v54
    %1604 = vmatprep.subr.mxu0 0.0
    %1605 = vmatpush1.msra.mxu0 %v53
    %1606 = vmatprep.subr.mxu0 0.0
    %1607 = vmatpush1.msra.mxu0 %v52
    %1608 = vmatprep.subr.mxu0 0.0
    %1609 = vmatpush2.msra.mxu0 0.0
    %1610 = vmatprep.subr.mxu0 0.0
    %1611 = vmatpush2.msra.mxu0 0.0
    %1612 = vmatprep.subr.mxu0 0.0
    %1613 = vmatpush2.msra.mxu0 0.0
    %1614 = vmatprep.subr.mxu0 0.0
    %1615 = vmatpush2.msra.mxu0 0.0
    %1616 = vmatprep.subr.mxu0 0.0
    %1617 = vmatpush2.msra.mxu0 0.0
    %1618 = vmatprep.subr.mxu0 0.0
    %1619 = vmatpush2.msra.mxu0 0.0
    %1620 = vmatprep.subr.mxu0 0.0
    %1621 = vmatpush2.msra.mxu0 0.0
    %1622 = vmatprep.subr.mxu0 0.0
    %1623 = vmatpush2.msra.mxu0 0.0
    %1624 = vmatprep.subr.mxu0 0.0
    %1625 = vmatpush2.msra.mxu0 0.0
    %1626 = vmatprep.subr.mxu0 0.0
    %1627 = vmatpush2.msra.mxu0 0.0
    %1628 = vmatprep.subr.mxu0 0.0
    %1629 = vmatpush2.msra.mxu0 0.0
    %1630 = vmatprep.subr.mxu0 0.0
    %1631 = vmatpush2.msra.mxu0 0.0
    %1632 = vmatprep.subr.mxu0 0.0
    %1633 = vmatpush2.msra.mxu0 0.0
    %1634 = vmatprep.subr.mxu0 0.0
    %1635 = vmatpush2.msra.mxu0 0.0
    %1636 = vmatprep.subr.mxu0 0.0
    %1637 = vmatpush2.msra.mxu0 0.0
    %1638 = vmatprep.subr.mxu0 0.0
    %1639 = vmatpush2.msra.mxu0 0.0
    %1640 = vmatprep.mubr.f32.mxu0 0.0
    %1641 = vmatmul.mubr.f32.gmra.mxu0 %v1574
    %v1642 = vpop.f32.mrf.mxu0
    %v1643 = vadd.f32 0.0, %v1642
    %v1644 = vpop.f32.mrf.mxu0
    %1645 = vdwg.mxu0
    %v1646 = vadd.f32 %v461, %v1643
    %v1647 = vmul.f32 %v1646, 0.5
    %v1648 = vtanh.pop %v1647
    %v1649 = vmul.f32 %v1648, 0.5
    %v1650 = vadd.f32 %v1649, 0.5
    %v1651 = vadd.f32 %v1643, %v456
    %1653 = vrot.lane.b32.xlu0 %v1651, 64
    %v1654 = vpop.permute.xlu0 %1653
    %v1656 = vmul.f32 %v1650, %v1654
    %1658 = vrot.lane.b32.xlu0 %v1656, 64
    %v1659 = vpop.permute.xlu0 %1658
    %v1661 = vadd.f32 %v429, %v1659
    %v1662 = vtanh.pop %v1661
    %v1663 = vsub.f32 1.0, %v1650
    %1665 = vrot.lane.b32.xlu0 %v1662, 96
    %v1666 = vpop.permute.xlu0 %1665
    %v1668 = vmul.f32 %v1663, %v1666
    %v1669 = vmul.f32 %v1650, %v1568
    %v1670 = vadd.f32 %v1668, %v1669
    %1672 = vrot.lane.b32.xlu0 %v1670, 96
    %v1673 = vpop.permute.xlu0 %1672
    %1675 = vst.msk [vmem:[#allocation2 + $0x18] sm:$0xff] %vm466, %v1673
    %v1676 = vsel %vm466, %v1673, 0
    %1678 = vmatprep.subr.mxu0 0.0
    %1679 = vmatpush1.msra.mxu0 0.0
    %1680 = vmatprep.subr.mxu0 0.0
    %1681 = vmatpush1.msra.mxu0 0.0
    %1682 = vmatprep.subr.mxu0 0.0
    %1683 = vmatpush1.msra.mxu0 0.0
    %1684 = vmatprep.subr.mxu0 0.0
    %1685 = vmatpush1.msra.mxu0 0.0
    %1686 = vmatprep.subr.mxu0 0.0
    %1687 = vmatpush1.msra.mxu0 0.0
    %1688 = vmatprep.subr.mxu0 0.0
    %1689 = vmatpush1.msra.mxu0 0.0
    %1690 = vmatprep.subr.mxu0 0.0
    %1691 = vmatpush1.msra.mxu0 0.0
    %1692 = vmatprep.subr.mxu0 0.0
    %1693 = vmatpush1.msra.mxu0 0.0
    %1694 = vmatprep.subr.mxu0 0.0
    %1695 = vmatpush1.msra.mxu0 0.0
    %1696 = vmatprep.subr.mxu0 0.0
    %1697 = vmatpush1.msra.mxu0 0.0
    %1698 = vmatprep.subr.mxu0 0.0
    %1699 = vmatpush1.msra.mxu0 0.0
    %1700 = vmatprep.subr.mxu0 0.0
    %1701 = vmatpush1.msra.mxu0 0.0
    %1702 = vmatprep.subr.mxu0 0.0
    %1703 = vmatpush1.msra.mxu0 %v55
    %1704 = vmatprep.subr.mxu0 0.0
    %1705 = vmatpush1.msra.mxu0 %v54
    %1706 = vmatprep.subr.mxu0 0.0
    %1707 = vmatpush1.msra.mxu0 %v53
    %1708 = vmatprep.subr.mxu0 0.0
    %1709 = vmatpush1.msra.mxu0 %v52
    %1710 = vmatprep.subr.mxu0 0.0
    %1711 = vmatpush2.msra.mxu0 0.0
    %1712 = vmatprep.subr.mxu0 0.0
    %1713 = vmatpush2.msra.mxu0 0.0
    %1714 = vmatprep.subr.mxu0 0.0
    %1715 = vmatpush2.msra.mxu0 0.0
    %1716 = vmatprep.subr.mxu0 0.0
    %1717 = vmatpush2.msra.mxu0 0.0
    %1718 = vmatprep.subr.mxu0 0.0
    %1719 = vmatpush2.msra.mxu0 0.0
    %1720 = vmatprep.subr.mxu0 0.0
    %1721 = vmatpush2.msra.mxu0 0.0
    %1722 = vmatprep.subr.mxu0 0.0
    %1723 = vmatpush2.msra.mxu0 0.0
    %1724 = vmatprep.subr.mxu0 0.0
    %1725 = vmatpush2.msra.mxu0 0.0
    %1726 = vmatprep.subr.mxu0 0.0
    %1727 = vmatpush2.msra.mxu0 0.0
    %1728 = vmatprep.subr.mxu0 0.0
    %1729 = vmatpush2.msra.mxu0 0.0
    %1730 = vmatprep.subr.mxu0 0.0
    %1731 = vmatpush2.msra.mxu0 0.0
    %1732 = vmatprep.subr.mxu0 0.0
    %1733 = vmatpush2.msra.mxu0 0.0
    %1734 = vmatprep.subr.mxu0 0.0
    %1735 = vmatpush2.msra.mxu0 0.0
    %1736 = vmatprep.subr.mxu0 0.0
    %1737 = vmatpush2.msra.mxu0 0.0
    %1738 = vmatprep.subr.mxu0 0.0
    %1739 = vmatpush2.msra.mxu0 0.0
    %1740 = vmatprep.subr.mxu0 0.0
    %1741 = vmatpush2.msra.mxu0 0.0
    %1742 = vmatprep.mubr.f32.mxu0 0.0
    %1743 = vmatmul.mubr.f32.gmra.mxu0 %v1676
    %v1744 = vpop.f32.mrf.mxu0
    %v1745 = vadd.f32 0.0, %v1744
    %v1746 = vpop.f32.mrf.mxu0
    %1747 = vdwg.mxu0
    %v1748 = vadd.f32 %v462, %v1745
    %v1749 = vmul.f32 %v1748, 0.5
    %v1750 = vtanh.pop %v1749
    %v1751 = vmul.f32 %v1750, 0.5
    %v1752 = vadd.f32 %v1751, 0.5
    %v1753 = vadd.f32 %v1745, %v456
    %1755 = vrot.lane.b32.xlu0 %v1753, 64
    %v1756 = vpop.permute.xlu0 %1755
    %v1758 = vmul.f32 %v1752, %v1756
    %1760 = vrot.lane.b32.xlu0 %v1758, 64
    %v1761 = vpop.permute.xlu0 %1760
    %v1763 = vadd.f32 %v434, %v1761
    %v1764 = vtanh.pop %v1763
    %v1765 = vsub.f32 1.0, %v1752
    %1767 = vrot.lane.b32.xlu0 %v1764, 96
    %v1768 = vpop.permute.xlu0 %1767
    %v1770 = vmul.f32 %v1765, %v1768
    %v1771 = vmul.f32 %v1752, %v1670
    %v1772 = vadd.f32 %v1770, %v1771
    %1774 = vrot.lane.b32.xlu0 %v1772, 96
    %v1775 = vpop.permute.xlu0 %1774
    %1777 = vst.msk [vmem:[#allocation2 + $0x20] sm:$0xff] %vm466, %v1775
    %v1778 = vsel %vm466, %v1775, 0
    %1780 = vmatprep.subr.mxu0 0.0
    %1781 = vmatpush1.msra.mxu0 0.0
    %1782 = vmatprep.subr.mxu0 0.0
    %1783 = vmatpush1.msra.mxu0 0.0
    %1784 = vmatprep.subr.mxu0 0.0
    %1785 = vmatpush1.msra.mxu0 0.0
    %1786 = vmatprep.subr.mxu0 0.0
    %1787 = vmatpush1.msra.mxu0 0.0
    %1788 = vmatprep.subr.mxu0 0.0
    %1789 = vmatpush1.msra.mxu0 0.0
    %1790 = vmatprep.subr.mxu0 0.0
    %1791 = vmatpush1.msra.mxu0 0.0
    %1792 = vmatprep.subr.mxu0 0.0
    %1793 = vmatpush1.msra.mxu0 0.0
    %1794 = vmatprep.subr.mxu0 0.0
    %1795 = vmatpush1.msra.mxu0 0.0
    %1796 = vmatprep.subr.mxu0 0.0
    %1797 = vmatpush1.msra.mxu0 0.0
    %1798 = vmatprep.subr.mxu0 0.0
    %1799 = vmatpush1.msra.mxu0 0.0
    %1800 = vmatprep.subr.mxu0 0.0
    %1801 = vmatpush1.msra.mxu0 0.0
    %1802 = vmatprep.subr.mxu0 0.0
    %1803 = vmatpush1.msra.mxu0 0.0
    %1804 = vmatprep.subr.mxu0 0.0
    %1805 = vmatpush1.msra.mxu0 %v55
    %1806 = vmatprep.subr.mxu0 0.0
    %1807 = vmatpush1.msra.mxu0 %v54
    %1808 = vmatprep.subr.mxu0 0.0
    %1809 = vmatpush1.msra.mxu0 %v53
    %1810 = vmatprep.subr.mxu0 0.0
    %1811 = vmatpush1.msra.mxu0 %v52
    %1812 = vmatprep.subr.mxu0 0.0
    %1813 = vmatpush2.msra.mxu0 0.0
    %1814 = vmatprep.subr.mxu0 0.0
    %1815 = vmatpush2.msra.mxu0 0.0
    %1816 = vmatprep.subr.mxu0 0.0
    %1817 = vmatpush2.msra.mxu0 0.0
    %1818 = vmatprep.subr.mxu0 0.0
    %1819 = vmatpush2.msra.mxu0 0.0
    %1820 = vmatprep.subr.mxu0 0.0
    %1821 = vmatpush2.msra.mxu0 0.0
    %1822 = vmatprep.subr.mxu0 0.0
    %1823 = vmatpush2.msra.mxu0 0.0
    %1824 = vmatprep.subr.mxu0 0.0
    %1825 = vmatpush2.msra.mxu0 0.0
    %1826 = vmatprep.subr.mxu0 0.0
    %1827 = vmatpush2.msra.mxu0 0.0
    %1828 = vmatprep.subr.mxu0 0.0
    %1829 = vmatpush2.msra.mxu0 0.0
    %1830 = vmatprep.subr.mxu0 0.0
    %1831 = vmatpush2.msra.mxu0 0.0
    %1832 = vmatprep.subr.mxu0 0.0
    %1833 = vmatpush2.msra.mxu0 0.0
    %1834 = vmatprep.subr.mxu0 0.0
    %1835 = vmatpush2.msra.mxu0 0.0
    %1836 = vmatprep.subr.mxu0 0.0
    %1837 = vmatpush2.msra.mxu0 0.0
    %1838 = vmatprep.subr.mxu0 0.0
    %1839 = vmatpush2.msra.mxu0 0.0
    %1840 = vmatprep.subr.mxu0 0.0
    %1841 = vmatpush2.msra.mxu0 0.0
    %1842 = vmatprep.subr.mxu0 0.0
    %1843 = vmatpush2.msra.mxu0 0.0
    %1844 = vmatprep.mubr.f32.mxu0 0.0
    %1845 = vmatmul.mubr.f32.gmra.mxu0 %v1778
    %v1846 = vpop.f32.mrf.mxu0
    %v1847 = vadd.f32 0.0, %v1846
    %v1848 = vpop.f32.mrf.mxu0
    %1849 = vdwg.mxu0
    %v1850 = vadd.f32 %v463, %v1847
    %v1851 = vmul.f32 %v1850, 0.5
    %v1852 = vtanh.pop %v1851
    %v1853 = vmul.f32 %v1852, 0.5
    %v1854 = vadd.f32 %v1853, 0.5
    %v1855 = vadd.f32 %v1847, %v456
    %1857 = vrot.lane.b32.xlu0 %v1855, 64
    %v1858 = vpop.permute.xlu0 %1857
    %v1860 = vmul.f32 %v1854, %v1858
    %1862 = vrot.lane.b32.xlu0 %v1860, 64
    %v1863 = vpop.permute.xlu0 %1862
    %v1865 = vadd.f32 %v439, %v1863
    %v1866 = vtanh.pop %v1865
    %v1867 = vsub.f32 1.0, %v1854
    %1869 = vrot.lane.b32.xlu0 %v1866, 96
    %v1870 = vpop.permute.xlu0 %1869
    %v1872 = vmul.f32 %v1867, %v1870
    %v1873 = vmul.f32 %v1854, %v1772
    %v1874 = vadd.f32 %v1872, %v1873
    %1876 = vrot.lane.b32.xlu0 %v1874, 96
    %v1877 = vpop.permute.xlu0 %1876
    %1879 = vst.msk [vmem:[#allocation2 + $0x28] sm:$0xff] %vm466, %v1877
    %v1880 = vsel %vm466, %v1877, 0
    %1882 = vmatprep.subr.mxu0 0.0
    %1883 = vmatpush1.msra.mxu0 0.0
    %1884 = vmatprep.subr.mxu0 0.0
    %1885 = vmatpush1.msra.mxu0 0.0
    %1886 = vmatprep.subr.mxu0 0.0
    %1887 = vmatpush1.msra.mxu0 0.0
    %1888 = vmatprep.subr.mxu0 0.0
    %1889 = vmatpush1.msra.mxu0 0.0
    %1890 = vmatprep.subr.mxu0 0.0
    %1891 = vmatpush1.msra.mxu0 0.0
    %1892 = vmatprep.subr.mxu0 0.0
    %1893 = vmatpush1.msra.mxu0 0.0
    %1894 = vmatprep.subr.mxu0 0.0
    %1895 = vmatpush1.msra.mxu0 0.0
    %1896 = vmatprep.subr.mxu0 0.0
    %1897 = vmatpush1.msra.mxu0 0.0
    %1898 = vmatprep.subr.mxu0 0.0
    %1899 = vmatpush1.msra.mxu0 0.0
    %1900 = vmatprep.subr.mxu0 0.0
    %1901 = vmatpush1.msra.mxu0 0.0
    %1902 = vmatprep.subr.mxu0 0.0
    %1903 = vmatpush1.msra.mxu0 0.0
    %1904 = vmatprep.subr.mxu0 0.0
    %1905 = vmatpush1.msra.mxu0 0.0
    %1906 = vmatprep.subr.mxu0 0.0
    %1907 = vmatpush1.msra.mxu0 %v55
    %1908 = vmatprep.subr.mxu0 0.0
    %1909 = vmatpush1.msra.mxu0 %v54
    %1910 = vmatprep.subr.mxu0 0.0
    %1911 = vmatpush1.msra.mxu0 %v53
    %1912 = vmatprep.subr.mxu0 0.0
    %1913 = vmatpush1.msra.mxu0 %v52
    %1914 = vmatprep.subr.mxu0 0.0
    %1915 = vmatpush2.msra.mxu0 0.0
    %1916 = vmatprep.subr.mxu0 0.0
    %1917 = vmatpush2.msra.mxu0 0.0
    %1918 = vmatprep.subr.mxu0 0.0
    %1919 = vmatpush2.msra.mxu0 0.0
    %1920 = vmatprep.subr.mxu0 0.0
    %1921 = vmatpush2.msra.mxu0 0.0
    %1922 = vmatprep.subr.mxu0 0.0
    %1923 = vmatpush2.msra.mxu0 0.0
    %1924 = vmatprep.subr.mxu0 0.0
    %1925 = vmatpush2.msra.mxu0 0.0
    %1926 = vmatprep.subr.mxu0 0.0
    %1927 = vmatpush2.msra.mxu0 0.0
    %1928 = vmatprep.subr.mxu0 0.0
    %1929 = vmatpush2.msra.mxu0 0.0
    %1930 = vmatprep.subr.mxu0 0.0
    %1931 = vmatpush2.msra.mxu0 0.0
    %1932 = vmatprep.subr.mxu0 0.0
    %1933 = vmatpush2.msra.mxu0 0.0
    %1934 = vmatprep.subr.mxu0 0.0
    %1935 = vmatpush2.msra.mxu0 0.0
    %1936 = vmatprep.subr.mxu0 0.0
    %1937 = vmatpush2.msra.mxu0 0.0
    %1938 = vmatprep.subr.mxu0 0.0
    %1939 = vmatpush2.msra.mxu0 0.0
    %1940 = vmatprep.subr.mxu0 0.0
    %1941 = vmatpush2.msra.mxu0 0.0
    %1942 = vmatprep.subr.mxu0 0.0
    %1943 = vmatpush2.msra.mxu0 0.0
    %1944 = vmatprep.subr.mxu0 0.0
    %1945 = vmatpush2.msra.mxu0 0.0
    %1946 = vmatprep.mubr.f32.mxu0 0.0
    %1947 = vmatmul.mubr.f32.gmra.mxu0 %v1880
    %v1948 = vpop.f32.mrf.mxu0
    %v1949 = vadd.f32 0.0, %v1948
    %v1950 = vpop.f32.mrf.mxu0
    %1951 = vdwg.mxu0
    %v1952 = vadd.f32 %v464, %v1949
    %v1953 = vmul.f32 %v1952, 0.5
    %v1954 = vtanh.pop %v1953
    %v1955 = vmul.f32 %v1954, 0.5
    %v1956 = vadd.f32 %v1955, 0.5
    %v1957 = vadd.f32 %v1949, %v456
    %1959 = vrot.lane.b32.xlu0 %v1957, 64
    %v1960 = vpop.permute.xlu0 %1959
    %v1962 = vmul.f32 %v1956, %v1960
    %1964 = vrot.lane.b32.xlu0 %v1962, 64
    %v1965 = vpop.permute.xlu0 %1964
    %v1967 = vadd.f32 %v444, %v1965
    %v1968 = vtanh.pop %v1967
    %v1969 = vsub.f32 1.0, %v1956
    %1971 = vrot.lane.b32.xlu0 %v1968, 96
    %v1972 = vpop.permute.xlu0 %1971
    %v1974 = vmul.f32 %v1969, %v1972
    %v1975 = vmul.f32 %v1956, %v1874
    %v1976 = vadd.f32 %v1974, %v1975
    %1978 = vrot.lane.b32.xlu0 %v1976, 96
    %v1979 = vpop.permute.xlu0 %1978
    %1981 = vst.msk [vmem:[#allocation2 + $0x30] sm:$0xff] %vm466, %v1979
    %v1982 = vsel %vm466, %v1979, 0
    %1984 = vmatprep.subr.mxu0 0.0
    %1985 = vmatpush1.msra.mxu0 0.0
    %1986 = vmatprep.subr.mxu0 0.0
    %1987 = vmatpush1.msra.mxu0 0.0
    %1988 = vmatprep.subr.mxu0 0.0
    %1989 = vmatpush1.msra.mxu0 0.0
    %1990 = vmatprep.subr.mxu0 0.0
    %1991 = vmatpush1.msra.mxu0 0.0
    %1992 = vmatprep.subr.mxu0 0.0
    %1993 = vmatpush1.msra.mxu0 0.0
    %1994 = vmatprep.subr.mxu0 0.0
    %1995 = vmatpush1.msra.mxu0 0.0
    %1996 = vmatprep.subr.mxu0 0.0
    %1997 = vmatpush1.msra.mxu0 0.0
    %1998 = vmatprep.subr.mxu0 0.0
    %1999 = vmatpush1.msra.mxu0 0.0
    %2000 = vmatprep.subr.mxu0 0.0
    %2001 = vmatpush1.msra.mxu0 0.0
    %2002 = vmatprep.subr.mxu0 0.0
    %2003 = vmatpush1.msra.mxu0 0.0
    %2004 = vmatprep.subr.mxu0 0.0
    %2005 = vmatpush1.msra.mxu0 0.0
    %2006 = vmatprep.subr.mxu0 0.0
    %2007 = vmatpush1.msra.mxu0 0.0
    %2008 = vmatprep.subr.mxu0 0.0
    %2009 = vmatpush1.msra.mxu0 %v55
    %2010 = vmatprep.subr.mxu0 0.0
    %2011 = vmatpush1.msra.mxu0 %v54
    %2012 = vmatprep.subr.mxu0 0.0
    %2013 = vmatpush1.msra.mxu0 %v53
    %2014 = vmatprep.subr.mxu0 0.0
    %2015 = vmatpush1.msra.mxu0 %v52
    %2016 = vmatprep.subr.mxu0 0.0
    %2017 = vmatpush2.msra.mxu0 0.0
    %2018 = vmatprep.subr.mxu0 0.0
    %2019 = vmatpush2.msra.mxu0 0.0
    %2020 = vmatprep.subr.mxu0 0.0
    %2021 = vmatpush2.msra.mxu0 0.0
    %2022 = vmatprep.subr.mxu0 0.0
    %2023 = vmatpush2.msra.mxu0 0.0
    %2024 = vmatprep.subr.mxu0 0.0
    %2025 = vmatpush2.msra.mxu0 0.0
    %2026 = vmatprep.subr.mxu0 0.0
    %2027 = vmatpush2.msra.mxu0 0.0
    %2028 = vmatprep.subr.mxu0 0.0
    %2029 = vmatpush2.msra.mxu0 0.0
    %2030 = vmatprep.subr.mxu0 0.0
    %2031 = vmatpush2.msra.mxu0 0.0
    %2032 = vmatprep.subr.mxu0 0.0
    %2033 = vmatpush2.msra.mxu0 0.0
    %2034 = vmatprep.subr.mxu0 0.0
    %2035 = vmatpush2.msra.mxu0 0.0
    %2036 = vmatprep.subr.mxu0 0.0
    %2037 = vmatpush2.msra.mxu0 0.0
    %2038 = vmatprep.subr.mxu0 0.0
    %2039 = vmatpush2.msra.mxu0 0.0
    %2040 = vmatprep.subr.mxu0 0.0
    %2041 = vmatpush2.msra.mxu0 0.0
    %2042 = vmatprep.subr.mxu0 0.0
    %2043 = vmatpush2.msra.mxu0 0.0
    %2044 = vmatprep.subr.mxu0 0.0
    %2045 = vmatpush2.msra.mxu0 0.0
    %2046 = vmatprep.subr.mxu0 0.0
    %2047 = vmatpush2.msra.mxu0 0.0
    %2048 = vmatprep.mubr.f32.mxu0 0.0
    %2049 = vmatmul.mubr.f32.gmra.mxu0 %v1982
    %v2050 = vpop.f32.mrf.mxu0
    %v2051 = vadd.f32 0.0, %v2050
    %v2052 = vpop.f32.mrf.mxu0
    %2053 = vdwg.mxu0
    %v2054 = vadd.f32 %v465, %v2051
    %v2055 = vmul.f32 %v2054, 0.5
    %v2056 = vtanh.pop %v2055
    %v2057 = vmul.f32 %v2056, 0.5
    %v2058 = vadd.f32 %v2057, 0.5
    %v2059 = vadd.f32 %v2051, %v456
    %2061 = vrot.lane.b32.xlu0 %v2059, 64
    %v2062 = vpop.permute.xlu0 %2061
    %v2064 = vmul.f32 %v2058, %v2062
    %2066 = vrot.lane.b32.xlu0 %v2064, 64
    %v2067 = vpop.permute.xlu0 %2066
    %v2069 = vadd.f32 %v449, %v2067
    %v2070 = vtanh.pop %v2069
    %v2071 = vsub.f32 1.0, %v2058
    %2073 = vrot.lane.b32.xlu0 %v2070, 96
    %v2074 = vpop.permute.xlu0 %2073
    %v2076 = vmul.f32 %v2071, %v2074
    %v2077 = vmul.f32 %v2058, %v1976
    %v2078 = vadd.f32 %v2076, %v2077
    %2080 = vrot.lane.b32.xlu0 %v2078, 96
    %v2081 = vpop.permute.xlu0 %2080
    %2083 = vst.msk [vmem:[#allocation2 + $0x38] sm:$0xff] %vm466, %v2081
    %v2084 = vld [vmem:[#allocation2] sm:$0xff]
    %v2085 = vld [vmem:[#allocation2 + $0x8] sm:$0xff]
    %v2086 = vld [vmem:[#allocation2 + $0x10] sm:$0xff]
    %v2087 = vld [vmem:[#allocation2 + $0x18] sm:$0xff]
    %v2088 = vld [vmem:[#allocation2 + $0x20] sm:$0xff]
    %v2089 = vld [vmem:[#allocation2 + $0x28] sm:$0xff]
    %v2090 = vld [vmem:[#allocation2 + $0x30] sm:$0xff]
    %v2091 = vld [vmem:[#allocation2 + $0x38] sm:$0xff]
    %v2092 = vld [vmem:[%s12] sm:$0xff]
    %v2093 = vld [vmem:[%s12 + $0x8] sm:$0xff]
    %v2094 = vld [vmem:[%s12 + $0x10] sm:$0xff]
    %v2095 = vld [vmem:[%s12 + $0x18] sm:$0xff]
    %v2096 = vld [vmem:[%s13] sm:$0x1]
    %v2098 = vlaneseq
    %v2099 = vshrl.u32 %v2098, 7
    %v2100 = vsub.s32 0, %v2099
    %v2101 = vrot.slane %v2096, %v2100
    %v2104 = vsel %vm466, %v2084, 0
    %v2107 = vsel %vm466, %v2085, 0
    %v2110 = vsel %vm466, %v2086, 0
    %v2113 = vsel %vm466, %v2087, 0
    %v2116 = vsel %vm466, %v2088, 0
    %v2119 = vsel %vm466, %v2089, 0
    %v2122 = vsel %vm466, %v2090, 0
    %v2125 = vsel %vm466, %v2091, 0
    %2127 = vmatprep.subr.mxu0 0.0
    %2128 = vmatpush1.msra.mxu0 0.0
    %2129 = vmatprep.subr.mxu0 0.0
    %2130 = vmatpush1.msra.mxu0 0.0
    %2131 = vmatprep.subr.mxu0 0.0
    %2132 = vmatpush1.msra.mxu0 0.0
    %2133 = vmatprep.subr.mxu0 0.0
    %2134 = vmatpush1.msra.mxu0 0.0
    %2135 = vmatprep.subr.mxu0 0.0
    %2136 = vmatpush1.msra.mxu0 0.0
    %2137 = vmatprep.subr.mxu0 0.0
    %2138 = vmatpush1.msra.mxu0 0.0
    %2139 = vmatprep.subr.mxu0 0.0
    %2140 = vmatpush1.msra.mxu0 0.0
    %2141 = vmatprep.subr.mxu0 0.0
    %2142 = vmatpush1.msra.mxu0 0.0
    %2143 = vmatprep.subr.mxu0 0.0
    %2144 = vmatpush1.msra.mxu0 0.0
    %2145 = vmatprep.subr.mxu0 0.0
    %2146 = vmatpush1.msra.mxu0 0.0
    %2147 = vmatprep.subr.mxu0 0.0
    %2148 = vmatpush1.msra.mxu0 0.0
    %2149 = vmatprep.subr.mxu0 0.0
    %2150 = vmatpush1.msra.mxu0 0.0
    %2151 = vmatprep.subr.mxu0 0.0
    %2152 = vmatpush1.msra.mxu0 %v2095
    %2153 = vmatprep.subr.mxu0 0.0
    %2154 = vmatpush1.msra.mxu0 %v2094
    %2155 = vmatprep.subr.mxu0 0.0
    %2156 = vmatpush1.msra.mxu0 %v2093
    %2157 = vmatprep.subr.mxu0 0.0
    %2158 = vmatpush1.msra.mxu0 %v2092
    %2159 = vmatprep.subr.mxu0 0.0
    %2160 = vmatpush2.msra.mxu0 0.0
    %2161 = vmatprep.subr.mxu0 0.0
    %2162 = vmatpush2.msra.mxu0 0.0
    %2163 = vmatprep.subr.mxu0 0.0
    %2164 = vmatpush2.msra.mxu0 0.0
    %2165 = vmatprep.subr.mxu0 0.0
    %2166 = vmatpush2.msra.mxu0 0.0
    %2167 = vmatprep.subr.mxu0 0.0
    %2168 = vmatpush2.msra.mxu0 0.0
    %2169 = vmatprep.subr.mxu0 0.0
    %2170 = vmatpush2.msra.mxu0 0.0
    %2171 = vmatprep.subr.mxu0 0.0
    %2172 = vmatpush2.msra.mxu0 0.0
    %2173 = vmatprep.subr.mxu0 0.0
    %2174 = vmatpush2.msra.mxu0 0.0
    %2175 = vmatprep.subr.mxu0 0.0
    %2176 = vmatpush2.msra.mxu0 0.0
    %2177 = vmatprep.subr.mxu0 0.0
    %2178 = vmatpush2.msra.mxu0 0.0
    %2179 = vmatprep.subr.mxu0 0.0
    %2180 = vmatpush2.msra.mxu0 0.0
    %2181 = vmatprep.subr.mxu0 0.0
    %2182 = vmatpush2.msra.mxu0 0.0
    %2183 = vmatprep.subr.mxu0 0.0
    %2184 = vmatpush2.msra.mxu0 0.0
    %2185 = vmatprep.subr.mxu0 0.0
    %2186 = vmatpush2.msra.mxu0 0.0
    %2187 = vmatprep.subr.mxu0 0.0
    %2188 = vmatpush2.msra.mxu0 0.0
    %2189 = vmatprep.subr.mxu0 0.0
    %2190 = vmatpush2.msra.mxu0 0.0
    %2191 = vmatprep.mubr.f32.mxu0 0.0
    %2192 = vmatmul.mubr.f32.gmra.mxu0 %v2104
    %v2193 = vpop.f32.mrf.mxu0
    %v2194 = vadd.f32 %v2101, %v2193
    %v2195 = vpop.f32.mrf.mxu0
    %2196 = vmatprep.mubr.f32.mxu0 0.0
    %2197 = vmatmul.mubr.f32.gmra.mxu0 %v2107
    %v2198 = vpop.f32.mrf.mxu0
    %v2199 = vadd.f32 %v2101, %v2198
    %v2200 = vpop.f32.mrf.mxu0
    %2201 = vmatprep.mubr.f32.mxu0 0.0
    %2202 = vmatmul.mubr.f32.gmra.mxu0 %v2110
    %v2203 = vpop.f32.mrf.mxu0
    %v2204 = vadd.f32 %v2101, %v2203
    %v2205 = vpop.f32.mrf.mxu0
    %2206 = vmatprep.mubr.f32.mxu0 0.0
    %2207 = vmatmul.mubr.f32.gmra.mxu0 %v2113
    %v2208 = vpop.f32.mrf.mxu0
    %v2209 = vadd.f32 %v2101, %v2208
    %v2210 = vpop.f32.mrf.mxu0
    %2211 = vmatprep.mubr.f32.mxu0 0.0
    %2212 = vmatmul.mubr.f32.gmra.mxu0 %v2116
    %v2213 = vpop.f32.mrf.mxu0
    %v2214 = vadd.f32 %v2101, %v2213
    %v2215 = vpop.f32.mrf.mxu0
    %2216 = vmatprep.mubr.f32.mxu0 0.0
    %2217 = vmatmul.mubr.f32.gmra.mxu0 %v2119
    %v2218 = vpop.f32.mrf.mxu0
    %v2219 = vadd.f32 %v2101, %v2218
    %v2220 = vpop.f32.mrf.mxu0
    %2221 = vmatprep.mubr.f32.mxu0 0.0
    %2222 = vmatmul.mubr.f32.gmra.mxu0 %v2122
    %v2223 = vpop.f32.mrf.mxu0
    %v2224 = vadd.f32 %v2101, %v2223
    %v2225 = vpop.f32.mrf.mxu0
    %2226 = vmatprep.mubr.f32.mxu0 0.0
    %2227 = vmatmul.mubr.f32.gmra.mxu0 %v2125
    %v2228 = vpop.f32.mrf.mxu0
    %v2229 = vadd.f32 %v2101, %v2228
    %v2230 = vpop.f32.mrf.mxu0
    %2231 = vdwg.mxu0
    %2232 = vmax.xlane.f32.xlu0 %v2194
    %v2233 = vpop.xlane.xlu0 %2232
    %2234 = vmax.xlane.f32.xlu0 %v2199
    %v2235 = vpop.xlane.xlu0 %2234
    %2236 = vmax.xlane.f32.xlu0 %v2204
    %v2237 = vpop.xlane.xlu0 %2236
    %2238 = vmax.xlane.f32.xlu0 %v2209
    %v2239 = vpop.xlane.xlu0 %2238
    %2240 = vmax.xlane.f32.xlu0 %v2214
    %v2241 = vpop.xlane.xlu0 %2240
    %2242 = vmax.xlane.f32.xlu0 %v2219
    %v2243 = vpop.xlane.xlu0 %2242
    %2244 = vmax.xlane.f32.xlu0 %v2224
    %v2245 = vpop.xlane.xlu0 %2244
    %2246 = vmax.xlane.f32.xlu0 %v2229
    %v2247 = vpop.xlane.xlu0 %2246
    %v2248 = vsub.f32 %v2194, %v2233
    %v2249 = vsub.f32 %v2199, %v2235
    %v2250 = vsub.f32 %v2204, %v2237
    %v2251 = vsub.f32 %v2209, %v2239
    %v2252 = vsub.f32 %v2214, %v2241
    %v2253 = vsub.f32 %v2219, %v2243
    %v2254 = vsub.f32 %v2224, %v2245
    %v2255 = vsub.f32 %v2229, %v2247
    %v2256 = vmul.f32 %v2248, 1.442695
    %v2257 = vpow.pop %v2256
    %v2258 = vmul.f32 %v2249, 1.442695
    %v2259 = vpow.pop %v2258
    %v2260 = vmul.f32 %v2250, 1.442695
    %v2261 = vpow.pop %v2260
    %v2262 = vmul.f32 %v2251, 1.442695
    %v2263 = vpow.pop %v2262
    %v2264 = vmul.f32 %v2252, 1.442695
    %v2265 = vpow.pop %v2264
    %v2266 = vmul.f32 %v2253, 1.442695
    %v2267 = vpow.pop %v2266
    %v2268 = vmul.f32 %v2254, 1.442695
    %v2269 = vpow.pop %v2268
    %v2270 = vmul.f32 %v2255, 1.442695
    %v2271 = vpow.pop %v2270
    %2272 = vadd.xlane.f32.xlu0 %v2257
    %v2273 = vpop.xlane.xlu0 %2272
    %2274 = vadd.xlane.f32.xlu0 %v2259
    %v2275 = vpop.xlane.xlu0 %2274
    %2276 = vadd.xlane.f32.xlu0 %v2261
    %v2277 = vpop.xlane.xlu0 %2276
    %2278 = vadd.xlane.f32.xlu0 %v2263
    %v2279 = vpop.xlane.xlu0 %2278
    %2280 = vadd.xlane.f32.xlu0 %v2265
    %v2281 = vpop.xlane.xlu0 %2280
    %2282 = vadd.xlane.f32.xlu0 %v2267
    %v2283 = vpop.xlane.xlu0 %2282
    %2284 = vadd.xlane.f32.xlu0 %v2269
    %v2285 = vpop.xlane.xlu0 %2284
    %2286 = vadd.xlane.f32.xlu0 %v2271
    %v2287 = vpop.xlane.xlu0 %2286
    %v2288 = vrcp.pop %v2273
    %v2289 = vrcp.pop %v2275
    %v2290 = vrcp.pop %v2277
    %v2291 = vrcp.pop %v2279
    %v2292 = vrcp.pop %v2281
    %v2293 = vrcp.pop %v2283
    %v2294 = vrcp.pop %v2285
    %v2295 = vrcp.pop %v2287
    %v2296 = vmul.f32 %v2257, %v2288
    %v2297 = vmul.f32 %v2259, %v2289
    %v2298 = vmul.f32 %v2261, %v2290
    %v2299 = vmul.f32 %v2263, %v2291
    %v2300 = vmul.f32 %v2265, %v2292
    %v2301 = vmul.f32 %v2267, %v2293
    %v2302 = vmul.f32 %v2269, %v2294
    %v2303 = vmul.f32 %v2271, %v2295
    %2304 = vst [vmem:[#allocation3] sm:$0xff] %v2296
    %2305 = vst [vmem:[#allocation3 + $0x8] sm:$0xff] %v2297
    %2306 = vst [vmem:[#allocation3 + $0x10] sm:$0xff] %v2298
    %2307 = vst [vmem:[#allocation3 + $0x18] sm:$0xff] %v2299
    %2308 = vst [vmem:[#allocation3 + $0x20] sm:$0xff] %v2300
    %2309 = vst [vmem:[#allocation3 + $0x28] sm:$0xff] %v2301
    %2310 = vst [vmem:[#allocation3 + $0x30] sm:$0xff] %v2302
    %2311 = vst [vmem:[#allocation3 + $0x38] sm:$0xff] %v2303
    // Predicated region
    $region58: #{tpu_custom_call.1} parent=1 // pred_check
      _
    $region59: #{tpu_custom_call.1} parent=1 // pred_check_branch
      %2313 = sbr.rel (0) target = $region61
    $region60: #{tpu_custom_call.1} parent=1 // pred_region
      %s2315 = ssub.s32 1024, 1024
      %2316 = vsyncadd [#allocation4], %s2315
      %s2317 = sshll.u32 [#allocation3], 4
      %s2318 = int_to_ptr.vmem [resolvable:$true] %s2317
      %2323 = dma.vmem_to_hbm [thread:$0]  %s2318, 1024, %s14, [#allocation4], 128, 128, 8
    $region61: #{tpu_custom_call.1} parent=1 // pred_fallthru
      _
    // Predicated region
    $region62: #{tpu_custom_call.1} parent=1 // pred_check
      _
    $region63: #{tpu_custom_call.1} parent=1 // pred_check_branch
      %2325 = sbr.rel (0) target = $region65
    $region64: #{tpu_custom_call.1} parent=1 // pred_region
      %2326 = dma.done [#allocation4], 1024
    $region65: #{tpu_custom_call.1} parent=1 // pred_fallthru
      _
    %2327 = vsyncpa [#allocation4], 1

</llo_original>
